<compile_context>
chip_gen: v7x
topology: tpu7x:2x2x1
jax: 0.10.0
libtpu: 0.0.40
codegen_flags: <defaults>
</compile_context>

<pallas_src>
import functools

import jax
import jax.numpy as jnp
from jax.experimental import pallas as pl
from jax.experimental.pallas import tpu as pltpu

NETWORK_SIZE = [256, 256, 128]   # matches the PyTorch module
TILE_B = 512                     # max batch rows per grid step
OUT_PAD = 128                    # lane-dense padded output width


def qnet_kernel(x_ref,
                w1_ref, b1_ref,
                w2_ref, b2_ref,
                w3_ref, b3_ref,
                w4_ref, b4_ref,
                o_ref):
    # One (tile_b, state_size) batch tile; all weights/biases use a constant
    # block index so they stay resident in VMEM across grid steps.
    x = x_ref[...]                                   # (tile_b, 4) float32

    # ---- Layer 1 on the VPU -------------------------------------------------
    # K = state_size = 4 would occupy a full MXU weight push at <2% contraction
    # utilization; 4 broadcast FMAs on the VPU are cheaper and f32-safe on v5e.
    w1 = w1_ref[...].astype(jnp.float32)             # (4, 256)
    h = b1_ref[...]                                   # (1, 256) f32, broadcasts
    for k in range(x.shape[1]):                       # static unroll (4 iters)
        h = h + x[:, k:k + 1] * w1[k:k + 1, :]
    h = jnp.maximum(h, 0.0).astype(jnp.bfloat16)

    # ---- Layers 2-4 on the MXU: bf16 inputs, f32 accumulation ---------------
    h = jnp.dot(h, w2_ref[...], preferred_element_type=jnp.float32) + b2_ref[...]
    h = jnp.maximum(h, 0.0).astype(jnp.bfloat16)

    h = jnp.dot(h, w3_ref[...], preferred_element_type=jnp.float32) + b3_ref[...]
    h = jnp.maximum(h, 0.0).astype(jnp.bfloat16)

    out = jnp.dot(h, w4_ref[...], preferred_element_type=jnp.float32) + b4_ref[...]
    o_ref[...] = out.astype(o_ref.dtype)              # bf16 lane-dense store


def _round_up(n, m):
    return ((n + m - 1) // m) * m


@functools.partial(jax.jit, static_argnames=("action_size", "tile_b"))
def qnetwork_forward(x, kparams, action_size, tile_b=TILE_B):
    """x: (B, state_size) float32.  kparams: output of prepare_params()
    (bf16 weights, (1, out) f32 biases, last layer pre-padded to OUT_PAD).
    Returns (B, action_size) bfloat16 Q-values."""
    B, state_size = x.shape

    # Effective tile: whole batch in one grid step when small, otherwise
    # tile_b-row tiles.  Multiples of 128 keep M-tiles MXU-aligned on
    # v5e/v6e/v7x; >=2 grid steps (B > tile_b) shard across v7x's 2 TCs.
    tile_eff = min(tile_b, _round_up(B, 128))
    b_pad = _round_up(B, tile_eff)
    if b_pad != B:
        x = jnp.pad(x, ((0, b_pad - B), (0, 0)))

    operands = (
        x,
        kparams["w1"], kparams["b1"],
        kparams["w2"], kparams["b2"],
        kparams["w3"], kparams["b3"],
        kparams["w4"], kparams["b4"],
    )

    in_specs = [pl.BlockSpec((tile_eff, state_size), lambda i: (i, 0))]
    # Full-array blocks with a constant block index -> VMEM resident.
    in_specs += [pl.BlockSpec(op.shape, lambda i: (0, 0)) for op in operands[1:]]
    out_specs = pl.BlockSpec((tile_eff, OUT_PAD), lambda i: (i, 0))

    out_padded = pl.pallas_call(
        qnet_kernel,
        out_shape=jax.ShapeDtypeStruct((b_pad, OUT_PAD), jnp.bfloat16),
        grid=(b_pad // tile_eff,),
        in_specs=in_specs,
        out_specs=out_specs,
        compiler_params=pltpu.CompilerParams(
            dimension_semantics=("parallel",),   # shards batch tiles across TCs
            vmem_limit_bytes=16 << 20,           # <= v5e scoped default
        ),
    )(*operands)

    return out_padded[:B, :action_size]


def init_params(key, state_size, action_size):
    """Raw float32 params mirroring nn.Linear default init
    (uniform +-1/sqrt(fan_in)); weights stored (in, out)."""
    dims = [state_size] + NETWORK_SIZE + [action_size]
    params = {}
    for i in range(4):
        fan_in, fan_out = dims[i], dims[i + 1]
        key, kw, kb = jax.random.split(key, 3)
        bound = 1.0 / (float(fan_in) ** 0.5)
        params[f"w{i + 1}"] = jax.random.uniform(
            kw, (fan_in, fan_out), jnp.float32, -bound, bound)
        params[f"b{i + 1}"] = jax.random.uniform(
            kb, (fan_out,), jnp.float32, -bound, bound)
    return params


def prepare_params(params):
    """ONE-TIME (init-time) conversion to kernel-ready params: bf16 weights,
    (1, out) f32 biases, and the last layer zero-padded to OUT_PAD lanes so
    the kernel's output store is lane-dense.  Not in the per-step hot path."""
    kp = {}
    for i in (1, 2, 3):
        kp[f"w{i}"] = params[f"w{i}"].astype(jnp.bfloat16)
        kp[f"b{i}"] = params[f"b{i}"].reshape(1, -1).astype(jnp.float32)
    hidden_last, action_size = params["w4"].shape
    w4p = jnp.zeros((hidden_last, OUT_PAD), jnp.bfloat16)
    w4p = w4p.at[:, :action_size].set(params["w4"].astype(jnp.bfloat16))
    b4p = jnp.zeros((1, OUT_PAD), jnp.float32)
    b4p = b4p.at[:, :action_size].set(params["b4"].reshape(1, -1))
    kp["w4"], kp["b4"] = w4p, b4p
    return jax.tree_util.tree_map(jax.device_put, kp)


def reference_forward(x, params):
    """Pure-JAX float32 reference matching the PyTorch module's arithmetic."""
    h = jnp.maximum(x @ params["w1"] + params["b1"], 0.0)
    h = jnp.maximum(h @ params["w2"] + params["b2"], 0.0)
    h = jnp.maximum(h @ params["w3"] + params["b3"], 0.0)
    return h @ params["w4"] + params["b4"]


if __name__ == "__main__":
    state_size = 4    # CartPole observation dim
    action_size = 2   # CartPole action dim
    batch = 256       # batched env states per call (single 256-row grid step)

    key = jax.random.PRNGKey(0)
    key, kx, kx2 = jax.random.split(key, 3)
    raw_params = init_params(key, state_size, action_size)
    kparams = prepare_params(raw_params)     # hoisted out of the forward path
    x = jax.random.normal(kx, (batch, state_size), jnp.float32)

    out = qnetwork_forward(x, kparams, action_size=action_size)
    out = jax.block_until_ready(out)
    assert out.shape == (batch, action_size)
    assert out.dtype == jnp.bfloat16

    # bf16 weights/activations/output are an intentional precision trade-off
    # vs. the f32 PyTorch module -> loose tolerance against the f32 reference.
    ref = reference_forward(x, raw_params)
    assert jnp.allclose(out.astype(jnp.float32), ref, atol=5e-2, rtol=5e-2), \
        "mismatch vs float32 JAX reference"

    # Batch that is not a multiple of 128 exercises the zero-row padding path.
    x2 = jax.random.normal(kx2, (37, state_size), jnp.float32)
    out2 = jax.block_until_ready(
        qnetwork_forward(x2, kparams, action_size=action_size))
    ref2 = reference_forward(x2, raw_params)
    assert out2.shape == (37, action_size)
    assert jnp.allclose(out2.astype(jnp.float32), ref2, atol=5e-2, rtol=5e-2), \
        "mismatch vs float32 JAX reference (padded batch)"

    print("KERNEL_OK")
</pallas_src>

<mosaic_0001>
module attributes {stable_mosaic.version = 11 : i64} {
  func.func @qnet_kernel(%arg0: i32, %arg1: memref<256x4xf32, #tpu.memory_space<vmem>>, %arg2: memref<4x256xbf16, #tpu.memory_space<vmem>>, %arg3: memref<1x256xf32, #tpu.memory_space<vmem>>, %arg4: memref<256x256xbf16, #tpu.memory_space<vmem>>, %arg5: memref<1x256xf32, #tpu.memory_space<vmem>>, %arg6: memref<256x128xbf16, #tpu.memory_space<vmem>>, %arg7: memref<1x128xf32, #tpu.memory_space<vmem>>, %arg8: memref<128x128xbf16, #tpu.memory_space<vmem>>, %arg9: memref<1x128xf32, #tpu.memory_space<vmem>>, %arg10: memref<256x128xbf16, #tpu.memory_space<vmem>>) attributes {dimension_semantics = [#tpu.dimension_semantics<parallel>], iteration_bounds = array<i64: 1>, scalar_prefetch = 0 : i64, scratch_operands = 0 : i64, tpu.core_type = #tpu.core_type<tc>, window_params = [{transform_indices = @transform_0, window_bounds = array<i64: 256, 4>}, {pipeline_mode = #tpu.pipeline_mode<synchronous>, transform_indices = @transform_1, window_bounds = array<i64: 4, 256>}, {pipeline_mode = #tpu.pipeline_mode<synchronous>, transform_indices = @transform_2, window_bounds = array<i64: 1, 256>}, {pipeline_mode = #tpu.pipeline_mode<synchronous>, transform_indices = @transform_3, window_bounds = array<i64: 256, 256>}, {pipeline_mode = #tpu.pipeline_mode<synchronous>, transform_indices = @transform_4, window_bounds = array<i64: 1, 256>}, {pipeline_mode = #tpu.pipeline_mode<synchronous>, transform_indices = @transform_5, window_bounds = array<i64: 256, 128>}, {pipeline_mode = #tpu.pipeline_mode<synchronous>, transform_indices = @transform_6, window_bounds = array<i64: 1, 128>}, {pipeline_mode = #tpu.pipeline_mode<synchronous>, transform_indices = @transform_7, window_bounds = array<i64: 128, 128>}, {pipeline_mode = #tpu.pipeline_mode<synchronous>, transform_indices = @transform_8, window_bounds = array<i64: 1, 128>}, {transform_indices = @transform_9, window_bounds = array<i64: 256, 128>}]} {
    %c0 = arith.constant 0 : index
    %c0_0 = arith.constant 0 : index
    %0 = vector.load %arg1[%c0, %c0_0] : memref<256x4xf32, #tpu.memory_space<vmem>>, vector<256x4xf32>
    %c0_1 = arith.constant 0 : index
    %c0_2 = arith.constant 0 : index
    %1 = vector.load %arg2[%c0_1, %c0_2] : memref<4x256xbf16, #tpu.memory_space<vmem>>, vector<4x256xbf16>
    %2 = arith.extf %1 : vector<4x256xbf16> to vector<4x256xf32>
    %c0_3 = arith.constant 0 : index
    %c0_4 = arith.constant 0 : index
    %3 = vector.load %arg3[%c0_3, %c0_4] : memref<1x256xf32, #tpu.memory_space<vmem>>, vector<1x256xf32>
    %4 = vector.extract_strided_slice %0 {offsets = [0, 0], sizes = [256, 1], strides = [1, 1]} : vector<256x4xf32> to vector<256x1xf32>
    %5 = vector.extract_strided_slice %2 {offsets = [0, 0], sizes = [1, 256], strides = [1, 1]} : vector<4x256xf32> to vector<1x256xf32>
    %6 = vector.broadcast %4 : vector<256x1xf32> to vector<256x256xf32>
    %7 = vector.broadcast %5 : vector<1x256xf32> to vector<256x256xf32>
    %8 = arith.mulf %6, %7 : vector<256x256xf32>
    %9 = vector.broadcast %3 : vector<1x256xf32> to vector<256x256xf32>
    %10 = arith.addf %9, %8 : vector<256x256xf32>
    %11 = vector.extract_strided_slice %0 {offsets = [0, 1], sizes = [256, 1], strides = [1, 1]} : vector<256x4xf32> to vector<256x1xf32>
    %12 = vector.extract_strided_slice %2 {offsets = [1, 0], sizes = [1, 256], strides = [1, 1]} : vector<4x256xf32> to vector<1x256xf32>
    %13 = vector.broadcast %11 : vector<256x1xf32> to vector<256x256xf32>
    %14 = vector.broadcast %12 : vector<1x256xf32> to vector<256x256xf32>
    %15 = arith.mulf %13, %14 : vector<256x256xf32>
    %16 = arith.addf %10, %15 : vector<256x256xf32>
    %17 = vector.extract_strided_slice %0 {offsets = [0, 2], sizes = [256, 1], strides = [1, 1]} : vector<256x4xf32> to vector<256x1xf32>
    %18 = vector.extract_strided_slice %2 {offsets = [2, 0], sizes = [1, 256], strides = [1, 1]} : vector<4x256xf32> to vector<1x256xf32>
    %19 = vector.broadcast %17 : vector<256x1xf32> to vector<256x256xf32>
    %20 = vector.broadcast %18 : vector<1x256xf32> to vector<256x256xf32>
    %21 = arith.mulf %19, %20 : vector<256x256xf32>
    %22 = arith.addf %16, %21 : vector<256x256xf32>
    %23 = vector.extract_strided_slice %0 {offsets = [0, 3], sizes = [256, 1], strides = [1, 1]} : vector<256x4xf32> to vector<256x1xf32>
    %24 = vector.extract_strided_slice %2 {offsets = [3, 0], sizes = [1, 256], strides = [1, 1]} : vector<4x256xf32> to vector<1x256xf32>
    %25 = vector.broadcast %23 : vector<256x1xf32> to vector<256x256xf32>
    %26 = vector.broadcast %24 : vector<1x256xf32> to vector<256x256xf32>
    %27 = arith.mulf %25, %26 : vector<256x256xf32>
    %28 = arith.addf %22, %27 : vector<256x256xf32>
    %cst = arith.constant 0.000000e+00 : f32
    %29 = vector.broadcast %cst : f32 to vector<256x256xf32>
    %30 = arith.maximumf %28, %29 : vector<256x256xf32>
    %31 = arith.truncf %30 : vector<256x256xf32> to vector<256x256xbf16>
    %c0_5 = arith.constant 0 : index
    %c0_6 = arith.constant 0 : index
    %32 = vector.load %arg4[%c0_5, %c0_6] : memref<256x256xbf16, #tpu.memory_space<vmem>>, vector<256x256xbf16>
    %cst_7 = arith.constant dense<0.000000e+00> : vector<256x256xf32>
    %33 = tpu.matmul %31, %32, %cst_7 {dimension_numbers = #tpu.dot_dimension_numbers<[1], [0], [0], [1], [0, 0, 1, 1], [], []>} : vector<256x256xbf16>, vector<256x256xbf16>, vector<256x256xf32> -> vector<256x256xf32>
    %c0_8 = arith.constant 0 : index
    %c0_9 = arith.constant 0 : index
    %34 = vector.load %arg5[%c0_8, %c0_9] : memref<1x256xf32, #tpu.memory_space<vmem>>, vector<1x256xf32>
    %35 = vector.broadcast %34 : vector<1x256xf32> to vector<256x256xf32>
    %36 = arith.addf %33, %35 : vector<256x256xf32>
    %cst_10 = arith.constant 0.000000e+00 : f32
    %37 = vector.broadcast %cst_10 : f32 to vector<256x256xf32>
    %38 = arith.maximumf %36, %37 : vector<256x256xf32>
    %39 = arith.truncf %38 : vector<256x256xf32> to vector<256x256xbf16>
    %c0_11 = arith.constant 0 : index
    %c0_12 = arith.constant 0 : index
    %40 = vector.load %arg6[%c0_11, %c0_12] : memref<256x128xbf16, #tpu.memory_space<vmem>>, vector<256x128xbf16>
    %cst_13 = arith.constant dense<0.000000e+00> : vector<256x128xf32>
    %41 = tpu.matmul %39, %40, %cst_13 {dimension_numbers = #tpu.dot_dimension_numbers<[1], [0], [0], [1], [0, 0, 1, 1], [], []>} : vector<256x256xbf16>, vector<256x128xbf16>, vector<256x128xf32> -> vector<256x128xf32>
    %c0_14 = arith.constant 0 : index
    %c0_15 = arith.constant 0 : index
    %42 = vector.load %arg7[%c0_14, %c0_15] : memref<1x128xf32, #tpu.memory_space<vmem>>, vector<1x128xf32>
    %43 = vector.broadcast %42 : vector<1x128xf32> to vector<256x128xf32>
    %44 = arith.addf %41, %43 : vector<256x128xf32>
    %cst_16 = arith.constant 0.000000e+00 : f32
    %45 = vector.broadcast %cst_16 : f32 to vector<256x128xf32>
    %46 = arith.maximumf %44, %45 : vector<256x128xf32>
    %47 = arith.truncf %46 : vector<256x128xf32> to vector<256x128xbf16>
    %c0_17 = arith.constant 0 : index
    %c0_18 = arith.constant 0 : index
    %48 = vector.load %arg8[%c0_17, %c0_18] : memref<128x128xbf16, #tpu.memory_space<vmem>>, vector<128x128xbf16>
    %cst_19 = arith.constant dense<0.000000e+00> : vector<256x128xf32>
    %49 = tpu.matmul %47, %48, %cst_19 {dimension_numbers = #tpu.dot_dimension_numbers<[1], [0], [0], [1], [0, 0, 1, 1], [], []>} : vector<256x128xbf16>, vector<128x128xbf16>, vector<256x128xf32> -> vector<256x128xf32>
    %c0_20 = arith.constant 0 : index
    %c0_21 = arith.constant 0 : index
    %50 = vector.load %arg9[%c0_20, %c0_21] : memref<1x128xf32, #tpu.memory_space<vmem>>, vector<1x128xf32>
    %51 = vector.broadcast %50 : vector<1x128xf32> to vector<256x128xf32>
    %52 = arith.addf %49, %51 : vector<256x128xf32>
    %53 = arith.truncf %52 : vector<256x128xf32> to vector<256x128xbf16>
    %c0_22 = arith.constant 0 : index
    %c0_23 = arith.constant 0 : index
    %54 = vector.load %arg10[%c0_22, %c0_23] : memref<256x128xbf16, #tpu.memory_space<vmem>>, vector<256x128xbf16>
    tpu.vector_store %arg10[%c0_22, %c0_23], %53 {strides = array<i32>} : memref<256x128xbf16, #tpu.memory_space<vmem>>, vector<256x128xbf16>,
    return
  }
  func.func @transform_0(%arg0: i32) -> (i32, i32) {
    %c0_i32 = arith.constant 0 : i32
    %c0_i32_0 = arith.constant 0 : i32
    return %arg0, %c0_i32 : i32, i32
  }
  func.func @transform_1(%arg0: i32) -> (i32, i32) {
    %c0_i32 = arith.constant 0 : i32
    %c0_i32_0 = arith.constant 0 : i32
    %c0_i32_1 = arith.constant 0 : i32
    return %c0_i32, %c0_i32_0 : i32, i32
  }
  func.func @transform_2(%arg0: i32) -> (i32, i32) {
    %c0_i32 = arith.constant 0 : i32
    %c0_i32_0 = arith.constant 0 : i32
    %c0_i32_1 = arith.constant 0 : i32
    return %c0_i32, %c0_i32_0 : i32, i32
  }
  func.func @transform_3(%arg0: i32) -> (i32, i32) {
    %c0_i32 = arith.constant 0 : i32
    %c0_i32_0 = arith.constant 0 : i32
    %c0_i32_1 = arith.constant 0 : i32
    return %c0_i32, %c0_i32_0 : i32, i32
  }
  func.func @transform_4(%arg0: i32) -> (i32, i32) {
    %c0_i32 = arith.constant 0 : i32
    %c0_i32_0 = arith.constant 0 : i32
    %c0_i32_1 = arith.constant 0 : i32
    return %c0_i32, %c0_i32_0 : i32, i32
  }
  func.func @transform_5(%arg0: i32) -> (i32, i32) {
    %c0_i32 = arith.constant 0 : i32
    %c0_i32_0 = arith.constant 0 : i32
    %c0_i32_1 = arith.constant 0 : i32
    return %c0_i32, %c0_i32_0 : i32, i32
  }
  func.func @transform_6(%arg0: i32) -> (i32, i32) {
    %c0_i32 = arith.constant 0 : i32
    %c0_i32_0 = arith.constant 0 : i32
    %c0_i32_1 = arith.constant 0 : i32
    return %c0_i32, %c0_i32_0 : i32, i32
  }
  func.func @transform_7(%arg0: i32) -> (i32, i32) {
    %c0_i32 = arith.constant 0 : i32
    %c0_i32_0 = arith.constant 0 : i32
    %c0_i32_1 = arith.constant 0 : i32
    return %c0_i32, %c0_i32_0 : i32, i32
  }
  func.func @transform_8(%arg0: i32) -> (i32, i32) {
    %c0_i32 = arith.constant 0 : i32
    %c0_i32_0 = arith.constant 0 : i32
    %c0_i32_1 = arith.constant 0 : i32
    return %c0_i32, %c0_i32_0 : i32, i32
  }
  func.func @transform_9(%arg0: i32) -> (i32, i32) {
    %c0_i32 = arith.constant 0 : i32
    %c0_i32_0 = arith.constant 0 : i32
    return %arg0, %c0_i32 : i32, i32
  }
}

</mosaic_0001>

<llo_original>
// kernel: qnetwork_forward.1
$region0: #{qnetwork_forward.1}
  #allocation0 [shape = 'u32[]', space=smem, size = 0x4, offset = 0x4, fixed_abs, tag = 'smem constant byte address 0x4 - core index']
  #allocation1 [shape = 'u32[144,128]{1,0:T(1,128)}', space=vmem, size = 0x12000, scoped, tag = 'internal scratch']
  %s0 = inlined_call_operand.vmem [shape: f32[256,4], index: 0, kind: input, shape index: {}]
  %s1 = inlined_call_operand.vmem [shape: bf16[4,256], index: 1, kind: input, shape index: {}]
  %s2 = inlined_call_operand.vmem [shape: f32[1,256], index: 2, kind: input, shape index: {}]
  %s3 = inlined_call_operand.vmem [shape: bf16[256,256], index: 3, kind: input, shape index: {}]
  %s4 = inlined_call_operand.vmem [shape: f32[1,256], index: 4, kind: input, shape index: {}]
  %s5 = inlined_call_operand.hbm [shape: bf16[256,128], index: 5, kind: input, shape index: {}]
  %s6 = inlined_call_operand.vmem [shape: f32[1,128], index: 6, kind: input, shape index: {}]
  %s7 = inlined_call_operand.hbm [shape: bf16[128,128], index: 7, kind: input, shape index: {}]
  %s8 = inlined_call_operand.vmem [shape: f32[1,128], index: 8, kind: input, shape index: {}]
  %s9 = inlined_call_operand.vmem [shape: bf16[256,128], index: 9, kind: output, shape index: {}]
  %s10 = sld [smem:[#allocation0]]
  $region54: #{qnetwork_forward.1} parent=0
    _
  %s12 = ssub.s32 1, %s10
  %s13 = scalar_select 0, %s12, %s10
  $region1: #{qnetwork_forward.1} parent=0
    #allocation2 [shape = 'u8[65536]{0}', space=vmem, size = 0x10000, scoped, tag = 'input window, operand 5, single buffered']
    #allocation3 [shape = 's32[1]{0}', space=sflag, size = 0x4, scoped, tag = 'scoped memory for qnetwork_forward.1']
    #allocation4 [shape = 'u8[32768]{0}', space=vmem, size = 0x8000, scoped, tag = 'input window, operand 7, single buffered']
    #allocation5 [shape = 's32[1]{0}', space=sflag, size = 0x4, scoped, tag = 'scoped memory for qnetwork_forward.1']
    %14 = vsyncpa [#allocation3], 0
    %15 = vsyncpa [#allocation5], 0
    // Predicated region
    $region2: #{qnetwork_forward.1} parent=1 // pred_check
      _
    $region3: #{qnetwork_forward.1} parent=1 // pred_check_branch
      %17 = sbr.rel (0) target = $region5
    $region4: #{qnetwork_forward.1} parent=1 // pred_region
      _
    $region5: #{qnetwork_forward.1} parent=1 // pred_fallthru
      _
    // Predicated region
    $region6: #{qnetwork_forward.1} parent=1 // pred_check
      _
    $region7: #{qnetwork_forward.1} parent=1 // pred_check_branch
      %19 = sbr.rel (0) target = $region9
    $region8: #{qnetwork_forward.1} parent=1 // pred_region
      _
    $region9: #{qnetwork_forward.1} parent=1 // pred_fallthru
      _
    // Predicated region
    $region10: #{qnetwork_forward.1} parent=1 // pred_check
      _
    $region11: #{qnetwork_forward.1} parent=1 // pred_check_branch
      %21 = sbr.rel (0) target = $region13
    $region12: #{qnetwork_forward.1} parent=1 // pred_region
      _
    $region13: #{qnetwork_forward.1} parent=1 // pred_fallthru
      _
    // Predicated region
    $region14: #{qnetwork_forward.1} parent=1 // pred_check
      _
    $region15: #{qnetwork_forward.1} parent=1 // pred_check_branch
      %23 = sbr.rel (0) target = $region17
    $region16: #{qnetwork_forward.1} parent=1 // pred_region
      _
    $region17: #{qnetwork_forward.1} parent=1 // pred_fallthru
      _
    // Predicated region
    $region18: #{qnetwork_forward.1} parent=1 // pred_check
      _
    $region19: #{qnetwork_forward.1} parent=1 // pred_check_branch
      %25 = sbr.rel (0) target = $region21
    $region20: #{qnetwork_forward.1} parent=1 // pred_region
      _
    $region21: #{qnetwork_forward.1} parent=1 // pred_fallthru
      _
    // Predicated region
    $region22: #{qnetwork_forward.1} parent=1 // pred_check
      _
    $region23: #{qnetwork_forward.1} parent=1 // pred_check_branch
      %27 = sbr.rel (0) target = $region25
    $region24: #{qnetwork_forward.1} parent=1 // pred_region
      %s29 = ssub.s32 2048, 2048
      %30 = vsyncadd [#allocation3], %s29
      %s31 = sshll.u32 [#allocation2], 4
      %s32 = int_to_ptr.vmem [resolvable:$true] %s31
      %37 = dma.hbm_to_vmem [thread:$0]  %s5, 2048, %s32, [#allocation3], 64, 64, 4
    $region25: #{qnetwork_forward.1} parent=1 // pred_fallthru
      _
    // Predicated region
    $region26: #{qnetwork_forward.1} parent=1 // pred_check
      _
    $region27: #{qnetwork_forward.1} parent=1 // pred_check_branch
      %39 = sbr.rel (0) target = $region29
    $region28: #{qnetwork_forward.1} parent=1 // pred_region
      _
    $region29: #{qnetwork_forward.1} parent=1 // pred_fallthru
      _
    // Predicated region
    $region30: #{qnetwork_forward.1} parent=1 // pred_check
      _
    $region31: #{qnetwork_forward.1} parent=1 // pred_check_branch
      %41 = sbr.rel (0) target = $region33
    $region32: #{qnetwork_forward.1} parent=1 // pred_region
      %s43 = ssub.s32 1024, 1024
      %44 = vsyncadd [#allocation5], %s43
      %s45 = sshll.u32 [#allocation4], 4
      %s46 = int_to_ptr.vmem [resolvable:$true] %s45
      %51 = dma.hbm_to_vmem [thread:$0]  %s7, 1024, %s46, [#allocation5], 64, 64, 4
    $region33: #{qnetwork_forward.1} parent=1 // pred_fallthru
      _
    // Predicated region
    $region34: #{qnetwork_forward.1} parent=1 // pred_check
      _
    $region35: #{qnetwork_forward.1} parent=1 // pred_check_branch
      %53 = sbr.rel (0) target = $region37
    $region36: #{qnetwork_forward.1} parent=1 // pred_region
      _
    $region37: #{qnetwork_forward.1} parent=1 // pred_fallthru
      _
    // Predicated region
    $region38: #{qnetwork_forward.1} parent=1 // pred_check
      _
    $region39: #{qnetwork_forward.1} parent=1 // pred_check_branch
      %55 = sbr.rel (0) target = $region41
    $region40: #{qnetwork_forward.1} parent=1 // pred_region
      %56 = dma.done [#allocation3], 2048
    $region41: #{qnetwork_forward.1} parent=1 // pred_fallthru
      _
    // Predicated region
    $region42: #{qnetwork_forward.1} parent=1 // pred_check
      _
    $region43: #{qnetwork_forward.1} parent=1 // pred_check_branch
      %58 = sbr.rel (0) target = $region45
    $region44: #{qnetwork_forward.1} parent=1 // pred_region
      %59 = dma.done [#allocation5], 1024
    $region45: #{qnetwork_forward.1} parent=1 // pred_fallthru
      _
    %v61 = vld [vmem:[%s0] sm:$0xff]
    %v62 = vld [vmem:[%s0 + $0x8] sm:$0xff]
    %v63 = vld [vmem:[%s0 + $0x10] sm:$0xff]
    %v64 = vld [vmem:[%s0 + $0x18] sm:$0xff]
    %v65 = vld [vmem:[%s0 + $0x20] sm:$0xff]
    %v66 = vld [vmem:[%s0 + $0x28] sm:$0xff]
    %v67 = vld [vmem:[%s0 + $0x30] sm:$0xff]
    %v68 = vld [vmem:[%s0 + $0x38] sm:$0xff]
    %v69 = vld [vmem:[%s0 + $0x40] sm:$0xff]
    %v70 = vld [vmem:[%s0 + $0x48] sm:$0xff]
    %v71 = vld [vmem:[%s0 + $0x50] sm:$0xff]
    %v72 = vld [vmem:[%s0 + $0x58] sm:$0xff]
    %v73 = vld [vmem:[%s0 + $0x60] sm:$0xff]
    %v74 = vld [vmem:[%s0 + $0x68] sm:$0xff]
    %v75 = vld [vmem:[%s0 + $0x70] sm:$0xff]
    %v76 = vld [vmem:[%s0 + $0x78] sm:$0xff]
    %v77 = vld [vmem:[%s0 + $0x80] sm:$0xff]
    %v78 = vld [vmem:[%s0 + $0x88] sm:$0xff]
    %v79 = vld [vmem:[%s0 + $0x90] sm:$0xff]
    %v80 = vld [vmem:[%s0 + $0x98] sm:$0xff]
    %v81 = vld [vmem:[%s0 + $0xa0] sm:$0xff]
    %v82 = vld [vmem:[%s0 + $0xa8] sm:$0xff]
    %v83 = vld [vmem:[%s0 + $0xb0] sm:$0xff]
    %v84 = vld [vmem:[%s0 + $0xb8] sm:$0xff]
    %v85 = vld [vmem:[%s0 + $0xc0] sm:$0xff]
    %v86 = vld [vmem:[%s0 + $0xc8] sm:$0xff]
    %v87 = vld [vmem:[%s0 + $0xd0] sm:$0xff]
    %v88 = vld [vmem:[%s0 + $0xd8] sm:$0xff]
    %v89 = vld [vmem:[%s0 + $0xe0] sm:$0xff]
    %v90 = vld [vmem:[%s0 + $0xe8] sm:$0xff]
    %v91 = vld [vmem:[%s0 + $0xf0] sm:$0xff]
    %v92 = vld [vmem:[%s0 + $0xf8] sm:$0xff]
    %v93 = vld [vmem:[%s1] sm:$0xf]
    %v94 = vunpack.c.l.bf16 %v93
    %v95 = vld [vmem:[%s2] sm:$0x3]
    %97 = vset.pattern.permute.xlu0 0
    %98 = vperm.xlu0 %97, %v61
    %v99 = vpop.permute.xlu0 %98
    %102 = vset.pattern.permute.xlu0 0
    %103 = vperm.xlu0 %102, %v62
    %v104 = vpop.permute.xlu0 %103
    %107 = vset.pattern.permute.xlu0 0
    %108 = vperm.xlu0 %107, %v63
    %v109 = vpop.permute.xlu0 %108
    %112 = vset.pattern.permute.xlu0 0
    %113 = vperm.xlu0 %112, %v64
    %v114 = vpop.permute.xlu0 %113
    %117 = vset.pattern.permute.xlu0 0
    %118 = vperm.xlu0 %117, %v65
    %v119 = vpop.permute.xlu0 %118
    %122 = vset.pattern.permute.xlu0 0
    %123 = vperm.xlu0 %122, %v66
    %v124 = vpop.permute.xlu0 %123
    %127 = vset.pattern.permute.xlu0 0
    %128 = vperm.xlu0 %127, %v67
    %v129 = vpop.permute.xlu0 %128
    %132 = vset.pattern.permute.xlu0 0
    %133 = vperm.xlu0 %132, %v68
    %v134 = vpop.permute.xlu0 %133
    %137 = vset.pattern.permute.xlu0 0
    %138 = vperm.xlu0 %137, %v69
    %v139 = vpop.permute.xlu0 %138
    %142 = vset.pattern.permute.xlu0 0
    %143 = vperm.xlu0 %142, %v70
    %v144 = vpop.permute.xlu0 %143
    %147 = vset.pattern.permute.xlu0 0
    %148 = vperm.xlu0 %147, %v71
    %v149 = vpop.permute.xlu0 %148
    %152 = vset.pattern.permute.xlu0 0
    %153 = vperm.xlu0 %152, %v72
    %v154 = vpop.permute.xlu0 %153
    %157 = vset.pattern.permute.xlu0 0
    %158 = vperm.xlu0 %157, %v73
    %v159 = vpop.permute.xlu0 %158
    %162 = vset.pattern.permute.xlu0 0
    %163 = vperm.xlu0 %162, %v74
    %v164 = vpop.permute.xlu0 %163
    %167 = vset.pattern.permute.xlu0 0
    %168 = vperm.xlu0 %167, %v75
    %v169 = vpop.permute.xlu0 %168
    %172 = vset.pattern.permute.xlu0 0
    %173 = vperm.xlu0 %172, %v76
    %v174 = vpop.permute.xlu0 %173
    %177 = vset.pattern.permute.xlu0 0
    %178 = vperm.xlu0 %177, %v77
    %v179 = vpop.permute.xlu0 %178
    %182 = vset.pattern.permute.xlu0 0
    %183 = vperm.xlu0 %182, %v78
    %v184 = vpop.permute.xlu0 %183
    %187 = vset.pattern.permute.xlu0 0
    %188 = vperm.xlu0 %187, %v79
    %v189 = vpop.permute.xlu0 %188
    %192 = vset.pattern.permute.xlu0 0
    %193 = vperm.xlu0 %192, %v80
    %v194 = vpop.permute.xlu0 %193
    %197 = vset.pattern.permute.xlu0 0
    %198 = vperm.xlu0 %197, %v81
    %v199 = vpop.permute.xlu0 %198
    %202 = vset.pattern.permute.xlu0 0
    %203 = vperm.xlu0 %202, %v82
    %v204 = vpop.permute.xlu0 %203
    %207 = vset.pattern.permute.xlu0 0
    %208 = vperm.xlu0 %207, %v83
    %v209 = vpop.permute.xlu0 %208
    %212 = vset.pattern.permute.xlu0 0
    %213 = vperm.xlu0 %212, %v84
    %v214 = vpop.permute.xlu0 %213
    %217 = vset.pattern.permute.xlu0 0
    %218 = vperm.xlu0 %217, %v85
    %v219 = vpop.permute.xlu0 %218
    %222 = vset.pattern.permute.xlu0 0
    %223 = vperm.xlu0 %222, %v86
    %v224 = vpop.permute.xlu0 %223
    %227 = vset.pattern.permute.xlu0 0
    %228 = vperm.xlu0 %227, %v87
    %v229 = vpop.permute.xlu0 %228
    %232 = vset.pattern.permute.xlu0 0
    %233 = vperm.xlu0 %232, %v88
    %v234 = vpop.permute.xlu0 %233
    %237 = vset.pattern.permute.xlu0 0
    %238 = vperm.xlu0 %237, %v89
    %v239 = vpop.permute.xlu0 %238
    %242 = vset.pattern.permute.xlu0 0
    %243 = vperm.xlu0 %242, %v90
    %v244 = vpop.permute.xlu0 %243
    %247 = vset.pattern.permute.xlu0 0
    %248 = vperm.xlu0 %247, %v91
    %v249 = vpop.permute.xlu0 %248
    %252 = vset.pattern.permute.xlu0 0
    %253 = vperm.xlu0 %252, %v92
    %v254 = vpop.permute.xlu0 %253
    %v257 = vlaneseq
    %v258 = vshrl.u32 %v257, 7
    %v259 = vsub.s32 0, %v258
    %v260 = vrot.slane %v94, %v259
    %v261 = vlaneseq
    %v262 = vshrl.u32 %v261, 7
    %v263 = vsub.s32 4, %v262
    %v264 = vrot.slane %v94, %v263
    %v267 = vlaneseq
    %v268 = vshrl.u32 %v267, 7
    %v269 = vsub.s32 0, %v268
    %v270 = vrot.slane %v260, %v269
    %v271 = vlaneseq
    %v272 = vshrl.u32 %v271, 7
    %v273 = vsub.s32 0, %v272
    %v274 = vrot.slane %v264, %v273
    %v275 = vmul.f32 %v99, %v270
    %v276 = vmul.f32 %v99, %v274
    %v277 = vmul.f32 %v104, %v270
    %v278 = vmul.f32 %v104, %v274
    %v279 = vmul.f32 %v109, %v270
    %v280 = vmul.f32 %v109, %v274
    %v281 = vmul.f32 %v114, %v270
    %v282 = vmul.f32 %v114, %v274
    %v283 = vmul.f32 %v119, %v270
    %v284 = vmul.f32 %v119, %v274
    %v285 = vmul.f32 %v124, %v270
    %v286 = vmul.f32 %v124, %v274
    %v287 = vmul.f32 %v129, %v270
    %v288 = vmul.f32 %v129, %v274
    %v289 = vmul.f32 %v134, %v270
    %v290 = vmul.f32 %v134, %v274
    %v291 = vmul.f32 %v139, %v270
    %v292 = vmul.f32 %v139, %v274
    %v293 = vmul.f32 %v144, %v270
    %v294 = vmul.f32 %v144, %v274
    %v295 = vmul.f32 %v149, %v270
    %v296 = vmul.f32 %v149, %v274
    %v297 = vmul.f32 %v154, %v270
    %v298 = vmul.f32 %v154, %v274
    %v299 = vmul.f32 %v159, %v270
    %v300 = vmul.f32 %v159, %v274
    %v301 = vmul.f32 %v164, %v270
    %v302 = vmul.f32 %v164, %v274
    %v303 = vmul.f32 %v169, %v270
    %v304 = vmul.f32 %v169, %v274
    %v305 = vmul.f32 %v174, %v270
    %v306 = vmul.f32 %v174, %v274
    %v307 = vmul.f32 %v179, %v270
    %v308 = vmul.f32 %v179, %v274
    %v309 = vmul.f32 %v184, %v270
    %v310 = vmul.f32 %v184, %v274
    %v311 = vmul.f32 %v189, %v270
    %v312 = vmul.f32 %v189, %v274
    %v313 = vmul.f32 %v194, %v270
    %v314 = vmul.f32 %v194, %v274
    %v315 = vmul.f32 %v199, %v270
    %v316 = vmul.f32 %v199, %v274
    %v317 = vmul.f32 %v204, %v270
    %v318 = vmul.f32 %v204, %v274
    %v319 = vmul.f32 %v209, %v270
    %v320 = vmul.f32 %v209, %v274
    %v321 = vmul.f32 %v214, %v270
    %v322 = vmul.f32 %v214, %v274
    %v323 = vmul.f32 %v219, %v270
    %v324 = vmul.f32 %v219, %v274
    %v325 = vmul.f32 %v224, %v270
    %v326 = vmul.f32 %v224, %v274
    %v327 = vmul.f32 %v229, %v270
    %v328 = vmul.f32 %v229, %v274
    %v329 = vmul.f32 %v234, %v270
    %v330 = vmul.f32 %v234, %v274
    %v331 = vmul.f32 %v239, %v270
    %v332 = vmul.f32 %v239, %v274
    %v333 = vmul.f32 %v244, %v270
    %v334 = vmul.f32 %v244, %v274
    %v335 = vmul.f32 %v249, %v270
    %v336 = vmul.f32 %v249, %v274
    %v337 = vmul.f32 %v254, %v270
    %v338 = vmul.f32 %v254, %v274
    %v340 = vlaneseq
    %v341 = vshrl.u32 %v340, 7
    %v342 = vsub.s32 0, %v341
    %v343 = vrot.slane %v95, %v342
    %v344 = vlaneseq
    %v345 = vshrl.u32 %v344, 7
    %v346 = vsub.s32 1, %v345
    %v347 = vrot.slane %v95, %v346
    %v350 = vadd.f32 %v343, %v275
    %v351 = vadd.f32 %v347, %v276
    %v352 = vadd.f32 %v343, %v277
    %v353 = vadd.f32 %v347, %v278
    %v354 = vadd.f32 %v343, %v279
    %v355 = vadd.f32 %v347, %v280
    %v356 = vadd.f32 %v343, %v281
    %v357 = vadd.f32 %v347, %v282
    %v358 = vadd.f32 %v343, %v283
    %v359 = vadd.f32 %v347, %v284
    %v360 = vadd.f32 %v343, %v285
    %v361 = vadd.f32 %v347, %v286
    %v362 = vadd.f32 %v343, %v287
    %v363 = vadd.f32 %v347, %v288
    %v364 = vadd.f32 %v343, %v289
    %v365 = vadd.f32 %v347, %v290
    %v366 = vadd.f32 %v343, %v291
    %v367 = vadd.f32 %v347, %v292
    %v368 = vadd.f32 %v343, %v293
    %v369 = vadd.f32 %v347, %v294
    %v370 = vadd.f32 %v343, %v295
    %v371 = vadd.f32 %v347, %v296
    %v372 = vadd.f32 %v343, %v297
    %v373 = vadd.f32 %v347, %v298
    %v374 = vadd.f32 %v343, %v299
    %v375 = vadd.f32 %v347, %v300
    %v376 = vadd.f32 %v343, %v301
    %v377 = vadd.f32 %v347, %v302
    %v378 = vadd.f32 %v343, %v303
    %v379 = vadd.f32 %v347, %v304
    %v380 = vadd.f32 %v343, %v305
    %v381 = vadd.f32 %v347, %v306
    %v382 = vadd.f32 %v343, %v307
    %v383 = vadd.f32 %v347, %v308
    %v384 = vadd.f32 %v343, %v309
    %v385 = vadd.f32 %v347, %v310
    %v386 = vadd.f32 %v343, %v311
    %v387 = vadd.f32 %v347, %v312
    %v388 = vadd.f32 %v343, %v313
    %v389 = vadd.f32 %v347, %v314
    %v390 = vadd.f32 %v343, %v315
    %v391 = vadd.f32 %v347, %v316
    %v392 = vadd.f32 %v343, %v317
    %v393 = vadd.f32 %v347, %v318
    %v394 = vadd.f32 %v343, %v319
    %v395 = vadd.f32 %v347, %v320
    %v396 = vadd.f32 %v343, %v321
    %v397 = vadd.f32 %v347, %v322
    %v398 = vadd.f32 %v343, %v323
    %v399 = vadd.f32 %v347, %v324
    %v400 = vadd.f32 %v343, %v325
    %v401 = vadd.f32 %v347, %v326
    %v402 = vadd.f32 %v343, %v327
    %v403 = vadd.f32 %v347, %v328
    %v404 = vadd.f32 %v343, %v329
    %v405 = vadd.f32 %v347, %v330
    %v406 = vadd.f32 %v343, %v331
    %v407 = vadd.f32 %v347, %v332
    %v408 = vadd.f32 %v343, %v333
    %v409 = vadd.f32 %v347, %v334
    %v410 = vadd.f32 %v343, %v335
    %v411 = vadd.f32 %v347, %v336
    %v412 = vadd.f32 %v343, %v337
    %v413 = vadd.f32 %v347, %v338
    %414 = vset.pattern.permute.xlu0 1
    %415 = vperm.xlu0 %414, %v61
    %v416 = vpop.permute.xlu0 %415
    %418 = vset.pattern.permute.xlu0 1
    %419 = vperm.xlu0 %418, %v62
    %v420 = vpop.permute.xlu0 %419
    %422 = vset.pattern.permute.xlu0 1
    %423 = vperm.xlu0 %422, %v63
    %v424 = vpop.permute.xlu0 %423
    %426 = vset.pattern.permute.xlu0 1
    %427 = vperm.xlu0 %426, %v64
    %v428 = vpop.permute.xlu0 %427
    %430 = vset.pattern.permute.xlu0 1
    %431 = vperm.xlu0 %430, %v65
    %v432 = vpop.permute.xlu0 %431
    %434 = vset.pattern.permute.xlu0 1
    %435 = vperm.xlu0 %434, %v66
    %v436 = vpop.permute.xlu0 %435
    %438 = vset.pattern.permute.xlu0 1
    %439 = vperm.xlu0 %438, %v67
    %v440 = vpop.permute.xlu0 %439
    %442 = vset.pattern.permute.xlu0 1
    %443 = vperm.xlu0 %442, %v68
    %v444 = vpop.permute.xlu0 %443
    %446 = vset.pattern.permute.xlu0 1
    %447 = vperm.xlu0 %446, %v69
    %v448 = vpop.permute.xlu0 %447
    %450 = vset.pattern.permute.xlu0 1
    %451 = vperm.xlu0 %450, %v70
    %v452 = vpop.permute.xlu0 %451
    %454 = vset.pattern.permute.xlu0 1
    %455 = vperm.xlu0 %454, %v71
    %v456 = vpop.permute.xlu0 %455
    %458 = vset.pattern.permute.xlu0 1
    %459 = vperm.xlu0 %458, %v72
    %v460 = vpop.permute.xlu0 %459
    %462 = vset.pattern.permute.xlu0 1
    %463 = vperm.xlu0 %462, %v73
    %v464 = vpop.permute.xlu0 %463
    %466 = vset.pattern.permute.xlu0 1
    %467 = vperm.xlu0 %466, %v74
    %v468 = vpop.permute.xlu0 %467
    %470 = vset.pattern.permute.xlu0 1
    %471 = vperm.xlu0 %470, %v75
    %v472 = vpop.permute.xlu0 %471
    %474 = vset.pattern.permute.xlu0 1
    %475 = vperm.xlu0 %474, %v76
    %v476 = vpop.permute.xlu0 %475
    %478 = vset.pattern.permute.xlu0 1
    %479 = vperm.xlu0 %478, %v77
    %v480 = vpop.permute.xlu0 %479
    %482 = vset.pattern.permute.xlu0 1
    %483 = vperm.xlu0 %482, %v78
    %v484 = vpop.permute.xlu0 %483
    %486 = vset.pattern.permute.xlu0 1
    %487 = vperm.xlu0 %486, %v79
    %v488 = vpop.permute.xlu0 %487
    %490 = vset.pattern.permute.xlu0 1
    %491 = vperm.xlu0 %490, %v80
    %v492 = vpop.permute.xlu0 %491
    %494 = vset.pattern.permute.xlu0 1
    %495 = vperm.xlu0 %494, %v81
    %v496 = vpop.permute.xlu0 %495
    %498 = vset.pattern.permute.xlu0 1
    %499 = vperm.xlu0 %498, %v82
    %v500 = vpop.permute.xlu0 %499
    %502 = vset.pattern.permute.xlu0 1
    %503 = vperm.xlu0 %502, %v83
    %v504 = vpop.permute.xlu0 %503
    %506 = vset.pattern.permute.xlu0 1
    %507 = vperm.xlu0 %506, %v84
    %v508 = vpop.permute.xlu0 %507
    %510 = vset.pattern.permute.xlu0 1
    %511 = vperm.xlu0 %510, %v85
    %v512 = vpop.permute.xlu0 %511
    %514 = vset.pattern.permute.xlu0 1
    %515 = vperm.xlu0 %514, %v86
    %v516 = vpop.permute.xlu0 %515
    %518 = vset.pattern.permute.xlu0 1
    %519 = vperm.xlu0 %518, %v87
    %v520 = vpop.permute.xlu0 %519
    %522 = vset.pattern.permute.xlu0 1
    %523 = vperm.xlu0 %522, %v88
    %v524 = vpop.permute.xlu0 %523
    %526 = vset.pattern.permute.xlu0 1
    %527 = vperm.xlu0 %526, %v89
    %v528 = vpop.permute.xlu0 %527
    %530 = vset.pattern.permute.xlu0 1
    %531 = vperm.xlu0 %530, %v90
    %v532 = vpop.permute.xlu0 %531
    %534 = vset.pattern.permute.xlu0 1
    %535 = vperm.xlu0 %534, %v91
    %v536 = vpop.permute.xlu0 %535
    %538 = vset.pattern.permute.xlu0 1
    %539 = vperm.xlu0 %538, %v92
    %v540 = vpop.permute.xlu0 %539
    %v542 = vlaneseq
    %v543 = vshrl.u32 %v542, 7
    %v544 = vsub.s32 1, %v543
    %v545 = vrot.slane %v94, %v544
    %v546 = vlaneseq
    %v547 = vshrl.u32 %v546, 7
    %v548 = vsub.s32 5, %v547
    %v549 = vrot.slane %v94, %v548
    %v552 = vlaneseq
    %v553 = vshrl.u32 %v552, 7
    %v554 = vsub.s32 1, %v553
    %v555 = vrot.slane %v545, %v554
    %v556 = vlaneseq
    %v557 = vshrl.u32 %v556, 7
    %v558 = vsub.s32 1, %v557
    %v559 = vrot.slane %v549, %v558
    %v560 = vmul.f32 %v416, %v555
    %v561 = vmul.f32 %v416, %v559
    %v562 = vmul.f32 %v420, %v555
    %v563 = vmul.f32 %v420, %v559
    %v564 = vmul.f32 %v424, %v555
    %v565 = vmul.f32 %v424, %v559
    %v566 = vmul.f32 %v428, %v555
    %v567 = vmul.f32 %v428, %v559
    %v568 = vmul.f32 %v432, %v555
    %v569 = vmul.f32 %v432, %v559
    %v570 = vmul.f32 %v436, %v555
    %v571 = vmul.f32 %v436, %v559
    %v572 = vmul.f32 %v440, %v555
    %v573 = vmul.f32 %v440, %v559
    %v574 = vmul.f32 %v444, %v555
    %v575 = vmul.f32 %v444, %v559
    %v576 = vmul.f32 %v448, %v555
    %v577 = vmul.f32 %v448, %v559
    %v578 = vmul.f32 %v452, %v555
    %v579 = vmul.f32 %v452, %v559
    %v580 = vmul.f32 %v456, %v555
    %v581 = vmul.f32 %v456, %v559
    %v582 = vmul.f32 %v460, %v555
    %v583 = vmul.f32 %v460, %v559
    %v584 = vmul.f32 %v464, %v555
    %v585 = vmul.f32 %v464, %v559
    %v586 = vmul.f32 %v468, %v555
    %v587 = vmul.f32 %v468, %v559
    %v588 = vmul.f32 %v472, %v555
    %v589 = vmul.f32 %v472, %v559
    %v590 = vmul.f32 %v476, %v555
    %v591 = vmul.f32 %v476, %v559
    %v592 = vmul.f32 %v480, %v555
    %v593 = vmul.f32 %v480, %v559
    %v594 = vmul.f32 %v484, %v555
    %v595 = vmul.f32 %v484, %v559
    %v596 = vmul.f32 %v488, %v555
    %v597 = vmul.f32 %v488, %v559
    %v598 = vmul.f32 %v492, %v555
    %v599 = vmul.f32 %v492, %v559
    %v600 = vmul.f32 %v496, %v555
    %v601 = vmul.f32 %v496, %v559
    %v602 = vmul.f32 %v500, %v555
    %v603 = vmul.f32 %v500, %v559
    %v604 = vmul.f32 %v504, %v555
    %v605 = vmul.f32 %v504, %v559
    %v606 = vmul.f32 %v508, %v555
    %v607 = vmul.f32 %v508, %v559
    %v608 = vmul.f32 %v512, %v555
    %v609 = vmul.f32 %v512, %v559
    %v610 = vmul.f32 %v516, %v555
    %v611 = vmul.f32 %v516, %v559
    %v612 = vmul.f32 %v520, %v555
    %v613 = vmul.f32 %v520, %v559
    %v614 = vmul.f32 %v524, %v555
    %v615 = vmul.f32 %v524, %v559
    %v616 = vmul.f32 %v528, %v555
    %v617 = vmul.f32 %v528, %v559
    %v618 = vmul.f32 %v532, %v555
    %v619 = vmul.f32 %v532, %v559
    %v620 = vmul.f32 %v536, %v555
    %v621 = vmul.f32 %v536, %v559
    %v622 = vmul.f32 %v540, %v555
    %v623 = vmul.f32 %v540, %v559
    %v624 = vadd.f32 %v350, %v560
    %v625 = vadd.f32 %v351, %v561
    %v626 = vadd.f32 %v352, %v562
    %v627 = vadd.f32 %v353, %v563
    %v628 = vadd.f32 %v354, %v564
    %v629 = vadd.f32 %v355, %v565
    %v630 = vadd.f32 %v356, %v566
    %v631 = vadd.f32 %v357, %v567
    %v632 = vadd.f32 %v358, %v568
    %v633 = vadd.f32 %v359, %v569
    %v634 = vadd.f32 %v360, %v570
    %v635 = vadd.f32 %v361, %v571
    %v636 = vadd.f32 %v362, %v572
    %v637 = vadd.f32 %v363, %v573
    %v638 = vadd.f32 %v364, %v574
    %v639 = vadd.f32 %v365, %v575
    %v640 = vadd.f32 %v366, %v576
    %v641 = vadd.f32 %v367, %v577
    %v642 = vadd.f32 %v368, %v578
    %v643 = vadd.f32 %v369, %v579
    %v644 = vadd.f32 %v370, %v580
    %v645 = vadd.f32 %v371, %v581
    %v646 = vadd.f32 %v372, %v582
    %v647 = vadd.f32 %v373, %v583
    %v648 = vadd.f32 %v374, %v584
    %v649 = vadd.f32 %v375, %v585
    %v650 = vadd.f32 %v376, %v586
    %v651 = vadd.f32 %v377, %v587
    %v652 = vadd.f32 %v378, %v588
    %v653 = vadd.f32 %v379, %v589
    %v654 = vadd.f32 %v380, %v590
    %v655 = vadd.f32 %v381, %v591
    %v656 = vadd.f32 %v382, %v592
    %v657 = vadd.f32 %v383, %v593
    %v658 = vadd.f32 %v384, %v594
    %v659 = vadd.f32 %v385, %v595
    %v660 = vadd.f32 %v386, %v596
    %v661 = vadd.f32 %v387, %v597
    %v662 = vadd.f32 %v388, %v598
    %v663 = vadd.f32 %v389, %v599
    %v664 = vadd.f32 %v390, %v600
    %v665 = vadd.f32 %v391, %v601
    %v666 = vadd.f32 %v392, %v602
    %v667 = vadd.f32 %v393, %v603
    %v668 = vadd.f32 %v394, %v604
    %v669 = vadd.f32 %v395, %v605
    %v670 = vadd.f32 %v396, %v606
    %v671 = vadd.f32 %v397, %v607
    %v672 = vadd.f32 %v398, %v608
    %v673 = vadd.f32 %v399, %v609
    %v674 = vadd.f32 %v400, %v610
    %v675 = vadd.f32 %v401, %v611
    %v676 = vadd.f32 %v402, %v612
    %v677 = vadd.f32 %v403, %v613
    %v678 = vadd.f32 %v404, %v614
    %v679 = vadd.f32 %v405, %v615
    %v680 = vadd.f32 %v406, %v616
    %v681 = vadd.f32 %v407, %v617
    %v682 = vadd.f32 %v408, %v618
    %v683 = vadd.f32 %v409, %v619
    %v684 = vadd.f32 %v410, %v620
    %v685 = vadd.f32 %v411, %v621
    %v686 = vadd.f32 %v412, %v622
    %v687 = vadd.f32 %v413, %v623
    %688 = vset.pattern.permute.xlu0 2
    %689 = vperm.xlu0 %688, %v61
    %v690 = vpop.permute.xlu0 %689
    %692 = vset.pattern.permute.xlu0 2
    %693 = vperm.xlu0 %692, %v62
    %v694 = vpop.permute.xlu0 %693
    %696 = vset.pattern.permute.xlu0 2
    %697 = vperm.xlu0 %696, %v63
    %v698 = vpop.permute.xlu0 %697
    %700 = vset.pattern.permute.xlu0 2
    %701 = vperm.xlu0 %700, %v64
    %v702 = vpop.permute.xlu0 %701
    %704 = vset.pattern.permute.xlu0 2
    %705 = vperm.xlu0 %704, %v65
    %v706 = vpop.permute.xlu0 %705
    %708 = vset.pattern.permute.xlu0 2
    %709 = vperm.xlu0 %708, %v66
    %v710 = vpop.permute.xlu0 %709
    %712 = vset.pattern.permute.xlu0 2
    %713 = vperm.xlu0 %712, %v67
    %v714 = vpop.permute.xlu0 %713
    %716 = vset.pattern.permute.xlu0 2
    %717 = vperm.xlu0 %716, %v68
    %v718 = vpop.permute.xlu0 %717
    %720 = vset.pattern.permute.xlu0 2
    %721 = vperm.xlu0 %720, %v69
    %v722 = vpop.permute.xlu0 %721
    %724 = vset.pattern.permute.xlu0 2
    %725 = vperm.xlu0 %724, %v70
    %v726 = vpop.permute.xlu0 %725
    %728 = vset.pattern.permute.xlu0 2
    %729 = vperm.xlu0 %728, %v71
    %v730 = vpop.permute.xlu0 %729
    %732 = vset.pattern.permute.xlu0 2
    %733 = vperm.xlu0 %732, %v72
    %v734 = vpop.permute.xlu0 %733
    %736 = vset.pattern.permute.xlu0 2
    %737 = vperm.xlu0 %736, %v73
    %v738 = vpop.permute.xlu0 %737
    %740 = vset.pattern.permute.xlu0 2
    %741 = vperm.xlu0 %740, %v74
    %v742 = vpop.permute.xlu0 %741
    %744 = vset.pattern.permute.xlu0 2
    %745 = vperm.xlu0 %744, %v75
    %v746 = vpop.permute.xlu0 %745
    %748 = vset.pattern.permute.xlu0 2
    %749 = vperm.xlu0 %748, %v76
    %v750 = vpop.permute.xlu0 %749
    %752 = vset.pattern.permute.xlu0 2
    %753 = vperm.xlu0 %752, %v77
    %v754 = vpop.permute.xlu0 %753
    %756 = vset.pattern.permute.xlu0 2
    %757 = vperm.xlu0 %756, %v78
    %v758 = vpop.permute.xlu0 %757
    %760 = vset.pattern.permute.xlu0 2
    %761 = vperm.xlu0 %760, %v79
    %v762 = vpop.permute.xlu0 %761
    %764 = vset.pattern.permute.xlu0 2
    %765 = vperm.xlu0 %764, %v80
    %v766 = vpop.permute.xlu0 %765
    %768 = vset.pattern.permute.xlu0 2
    %769 = vperm.xlu0 %768, %v81
    %v770 = vpop.permute.xlu0 %769
    %772 = vset.pattern.permute.xlu0 2
    %773 = vperm.xlu0 %772, %v82
    %v774 = vpop.permute.xlu0 %773
    %776 = vset.pattern.permute.xlu0 2
    %777 = vperm.xlu0 %776, %v83
    %v778 = vpop.permute.xlu0 %777
    %780 = vset.pattern.permute.xlu0 2
    %781 = vperm.xlu0 %780, %v84
    %v782 = vpop.permute.xlu0 %781
    %784 = vset.pattern.permute.xlu0 2
    %785 = vperm.xlu0 %784, %v85
    %v786 = vpop.permute.xlu0 %785
    %788 = vset.pattern.permute.xlu0 2
    %789 = vperm.xlu0 %788, %v86
    %v790 = vpop.permute.xlu0 %789
    %792 = vset.pattern.permute.xlu0 2
    %793 = vperm.xlu0 %792, %v87
    %v794 = vpop.permute.xlu0 %793
    %796 = vset.pattern.permute.xlu0 2
    %797 = vperm.xlu0 %796, %v88
    %v798 = vpop.permute.xlu0 %797
    %800 = vset.pattern.permute.xlu0 2
    %801 = vperm.xlu0 %800, %v89
    %v802 = vpop.permute.xlu0 %801
    %804 = vset.pattern.permute.xlu0 2
    %805 = vperm.xlu0 %804, %v90
    %v806 = vpop.permute.xlu0 %805
    %808 = vset.pattern.permute.xlu0 2
    %809 = vperm.xlu0 %808, %v91
    %v810 = vpop.permute.xlu0 %809
    %812 = vset.pattern.permute.xlu0 2
    %813 = vperm.xlu0 %812, %v92
    %v814 = vpop.permute.xlu0 %813
    %v816 = vlaneseq
    %v817 = vshrl.u32 %v816, 7
    %v818 = vsub.s32 2, %v817
    %v819 = vrot.slane %v94, %v818
    %v820 = vlaneseq
    %v821 = vshrl.u32 %v820, 7
    %v822 = vsub.s32 6, %v821
    %v823 = vrot.slane %v94, %v822
    %v826 = vlaneseq
    %v827 = vshrl.u32 %v826, 7
    %v828 = vsub.s32 2, %v827
    %v829 = vrot.slane %v819, %v828
    %v830 = vlaneseq
    %v831 = vshrl.u32 %v830, 7
    %v832 = vsub.s32 2, %v831
    %v833 = vrot.slane %v823, %v832
    %v834 = vmul.f32 %v690, %v829
    %v835 = vmul.f32 %v690, %v833
    %v836 = vmul.f32 %v694, %v829
    %v837 = vmul.f32 %v694, %v833
    %v838 = vmul.f32 %v698, %v829
    %v839 = vmul.f32 %v698, %v833
    %v840 = vmul.f32 %v702, %v829
    %v841 = vmul.f32 %v702, %v833
    %v842 = vmul.f32 %v706, %v829
    %v843 = vmul.f32 %v706, %v833
    %v844 = vmul.f32 %v710, %v829
    %v845 = vmul.f32 %v710, %v833
    %v846 = vmul.f32 %v714, %v829
    %v847 = vmul.f32 %v714, %v833
    %v848 = vmul.f32 %v718, %v829
    %v849 = vmul.f32 %v718, %v833
    %v850 = vmul.f32 %v722, %v829
    %v851 = vmul.f32 %v722, %v833
    %v852 = vmul.f32 %v726, %v829
    %v853 = vmul.f32 %v726, %v833
    %v854 = vmul.f32 %v730, %v829
    %v855 = vmul.f32 %v730, %v833
    %v856 = vmul.f32 %v734, %v829
    %v857 = vmul.f32 %v734, %v833
    %v858 = vmul.f32 %v738, %v829
    %v859 = vmul.f32 %v738, %v833
    %v860 = vmul.f32 %v742, %v829
    %v861 = vmul.f32 %v742, %v833
    %v862 = vmul.f32 %v746, %v829
    %v863 = vmul.f32 %v746, %v833
    %v864 = vmul.f32 %v750, %v829
    %v865 = vmul.f32 %v750, %v833
    %v866 = vmul.f32 %v754, %v829
    %v867 = vmul.f32 %v754, %v833
    %v868 = vmul.f32 %v758, %v829
    %v869 = vmul.f32 %v758, %v833
    %v870 = vmul.f32 %v762, %v829
    %v871 = vmul.f32 %v762, %v833
    %v872 = vmul.f32 %v766, %v829
    %v873 = vmul.f32 %v766, %v833
    %v874 = vmul.f32 %v770, %v829
    %v875 = vmul.f32 %v770, %v833
    %v876 = vmul.f32 %v774, %v829
    %v877 = vmul.f32 %v774, %v833
    %v878 = vmul.f32 %v778, %v829
    %v879 = vmul.f32 %v778, %v833
    %v880 = vmul.f32 %v782, %v829
    %v881 = vmul.f32 %v782, %v833
    %v882 = vmul.f32 %v786, %v829
    %v883 = vmul.f32 %v786, %v833
    %v884 = vmul.f32 %v790, %v829
    %v885 = vmul.f32 %v790, %v833
    %v886 = vmul.f32 %v794, %v829
    %v887 = vmul.f32 %v794, %v833
    %v888 = vmul.f32 %v798, %v829
    %v889 = vmul.f32 %v798, %v833
    %v890 = vmul.f32 %v802, %v829
    %v891 = vmul.f32 %v802, %v833
    %v892 = vmul.f32 %v806, %v829
    %v893 = vmul.f32 %v806, %v833
    %v894 = vmul.f32 %v810, %v829
    %v895 = vmul.f32 %v810, %v833
    %v896 = vmul.f32 %v814, %v829
    %v897 = vmul.f32 %v814, %v833
    %v898 = vadd.f32 %v624, %v834
    %v899 = vadd.f32 %v625, %v835
    %v900 = vadd.f32 %v626, %v836
    %v901 = vadd.f32 %v627, %v837
    %v902 = vadd.f32 %v628, %v838
    %v903 = vadd.f32 %v629, %v839
    %v904 = vadd.f32 %v630, %v840
    %v905 = vadd.f32 %v631, %v841
    %v906 = vadd.f32 %v632, %v842
    %v907 = vadd.f32 %v633, %v843
    %v908 = vadd.f32 %v634, %v844
    %v909 = vadd.f32 %v635, %v845
    %v910 = vadd.f32 %v636, %v846
    %v911 = vadd.f32 %v637, %v847
    %v912 = vadd.f32 %v638, %v848
    %v913 = vadd.f32 %v639, %v849
    %v914 = vadd.f32 %v640, %v850
    %v915 = vadd.f32 %v641, %v851
    %v916 = vadd.f32 %v642, %v852
    %v917 = vadd.f32 %v643, %v853
    %v918 = vadd.f32 %v644, %v854
    %v919 = vadd.f32 %v645, %v855
    %v920 = vadd.f32 %v646, %v856
    %v921 = vadd.f32 %v647, %v857
    %v922 = vadd.f32 %v648, %v858
    %v923 = vadd.f32 %v649, %v859
    %v924 = vadd.f32 %v650, %v860
    %v925 = vadd.f32 %v651, %v861
    %v926 = vadd.f32 %v652, %v862
    %v927 = vadd.f32 %v653, %v863
    %v928 = vadd.f32 %v654, %v864
    %v929 = vadd.f32 %v655, %v865
    %v930 = vadd.f32 %v656, %v866
    %v931 = vadd.f32 %v657, %v867
    %v932 = vadd.f32 %v658, %v868
    %v933 = vadd.f32 %v659, %v869
    %v934 = vadd.f32 %v660, %v870
    %v935 = vadd.f32 %v661, %v871
    %v936 = vadd.f32 %v662, %v872
    %v937 = vadd.f32 %v663, %v873
    %v938 = vadd.f32 %v664, %v874
    %v939 = vadd.f32 %v665, %v875
    %v940 = vadd.f32 %v666, %v876
    %v941 = vadd.f32 %v667, %v877
    %v942 = vadd.f32 %v668, %v878
    %v943 = vadd.f32 %v669, %v879
    %v944 = vadd.f32 %v670, %v880
    %v945 = vadd.f32 %v671, %v881
    %v946 = vadd.f32 %v672, %v882
    %v947 = vadd.f32 %v673, %v883
    %v948 = vadd.f32 %v674, %v884
    %v949 = vadd.f32 %v675, %v885
    %v950 = vadd.f32 %v676, %v886
    %v951 = vadd.f32 %v677, %v887
    %v952 = vadd.f32 %v678, %v888
    %v953 = vadd.f32 %v679, %v889
    %v954 = vadd.f32 %v680, %v890
    %v955 = vadd.f32 %v681, %v891
    %v956 = vadd.f32 %v682, %v892
    %v957 = vadd.f32 %v683, %v893
    %v958 = vadd.f32 %v684, %v894
    %v959 = vadd.f32 %v685, %v895
    %v960 = vadd.f32 %v686, %v896
    %v961 = vadd.f32 %v687, %v897
    %962 = vset.pattern.permute.xlu0 3
    %963 = vperm.xlu0 %962, %v61
    %v964 = vpop.permute.xlu0 %963
    %966 = vset.pattern.permute.xlu0 3
    %967 = vperm.xlu0 %966, %v62
    %v968 = vpop.permute.xlu0 %967
    %970 = vset.pattern.permute.xlu0 3
    %971 = vperm.xlu0 %970, %v63
    %v972 = vpop.permute.xlu0 %971
    %974 = vset.pattern.permute.xlu0 3
    %975 = vperm.xlu0 %974, %v64
    %v976 = vpop.permute.xlu0 %975
    %978 = vset.pattern.permute.xlu0 3
    %979 = vperm.xlu0 %978, %v65
    %v980 = vpop.permute.xlu0 %979
    %982 = vset.pattern.permute.xlu0 3
    %983 = vperm.xlu0 %982, %v66
    %v984 = vpop.permute.xlu0 %983
    %986 = vset.pattern.permute.xlu0 3
    %987 = vperm.xlu0 %986, %v67
    %v988 = vpop.permute.xlu0 %987
    %990 = vset.pattern.permute.xlu0 3
    %991 = vperm.xlu0 %990, %v68
    %v992 = vpop.permute.xlu0 %991
    %994 = vset.pattern.permute.xlu0 3
    %995 = vperm.xlu0 %994, %v69
    %v996 = vpop.permute.xlu0 %995
    %998 = vset.pattern.permute.xlu0 3
    %999 = vperm.xlu0 %998, %v70
    %v1000 = vpop.permute.xlu0 %999
    %1002 = vset.pattern.permute.xlu0 3
    %1003 = vperm.xlu0 %1002, %v71
    %v1004 = vpop.permute.xlu0 %1003
    %1006 = vset.pattern.permute.xlu0 3
    %1007 = vperm.xlu0 %1006, %v72
    %v1008 = vpop.permute.xlu0 %1007
    %1010 = vset.pattern.permute.xlu0 3
    %1011 = vperm.xlu0 %1010, %v73
    %v1012 = vpop.permute.xlu0 %1011
    %1014 = vset.pattern.permute.xlu0 3
    %1015 = vperm.xlu0 %1014, %v74
    %v1016 = vpop.permute.xlu0 %1015
    %1018 = vset.pattern.permute.xlu0 3
    %1019 = vperm.xlu0 %1018, %v75
    %v1020 = vpop.permute.xlu0 %1019
    %1022 = vset.pattern.permute.xlu0 3
    %1023 = vperm.xlu0 %1022, %v76
    %v1024 = vpop.permute.xlu0 %1023
    %1026 = vset.pattern.permute.xlu0 3
    %1027 = vperm.xlu0 %1026, %v77
    %v1028 = vpop.permute.xlu0 %1027
    %1030 = vset.pattern.permute.xlu0 3
    %1031 = vperm.xlu0 %1030, %v78
    %v1032 = vpop.permute.xlu0 %1031
    %1034 = vset.pattern.permute.xlu0 3
    %1035 = vperm.xlu0 %1034, %v79
    %v1036 = vpop.permute.xlu0 %1035
    %1038 = vset.pattern.permute.xlu0 3
    %1039 = vperm.xlu0 %1038, %v80
    %v1040 = vpop.permute.xlu0 %1039
    %1042 = vset.pattern.permute.xlu0 3
    %1043 = vperm.xlu0 %1042, %v81
    %v1044 = vpop.permute.xlu0 %1043
    %1046 = vset.pattern.permute.xlu0 3
    %1047 = vperm.xlu0 %1046, %v82
    %v1048 = vpop.permute.xlu0 %1047
    %1050 = vset.pattern.permute.xlu0 3
    %1051 = vperm.xlu0 %1050, %v83
    %v1052 = vpop.permute.xlu0 %1051
    %1054 = vset.pattern.permute.xlu0 3
    %1055 = vperm.xlu0 %1054, %v84
    %v1056 = vpop.permute.xlu0 %1055
    %1058 = vset.pattern.permute.xlu0 3
    %1059 = vperm.xlu0 %1058, %v85
    %v1060 = vpop.permute.xlu0 %1059
    %1062 = vset.pattern.permute.xlu0 3
    %1063 = vperm.xlu0 %1062, %v86
    %v1064 = vpop.permute.xlu0 %1063
    %1066 = vset.pattern.permute.xlu0 3
    %1067 = vperm.xlu0 %1066, %v87
    %v1068 = vpop.permute.xlu0 %1067
    %1070 = vset.pattern.permute.xlu0 3
    %1071 = vperm.xlu0 %1070, %v88
    %v1072 = vpop.permute.xlu0 %1071
    %1074 = vset.pattern.permute.xlu0 3
    %1075 = vperm.xlu0 %1074, %v89
    %v1076 = vpop.permute.xlu0 %1075
    %1078 = vset.pattern.permute.xlu0 3
    %1079 = vperm.xlu0 %1078, %v90
    %v1080 = vpop.permute.xlu0 %1079
    %1082 = vset.pattern.permute.xlu0 3
    %1083 = vperm.xlu0 %1082, %v91
    %v1084 = vpop.permute.xlu0 %1083
    %1086 = vset.pattern.permute.xlu0 3
    %1087 = vperm.xlu0 %1086, %v92
    %v1088 = vpop.permute.xlu0 %1087
    %v1090 = vlaneseq
    %v1091 = vshrl.u32 %v1090, 7
    %v1092 = vsub.s32 3, %v1091
    %v1093 = vrot.slane %v94, %v1092
    %v1094 = vlaneseq
    %v1095 = vshrl.u32 %v1094, 7
    %v1096 = vsub.s32 7, %v1095
    %v1097 = vrot.slane %v94, %v1096
    %v1100 = vlaneseq
    %v1101 = vshrl.u32 %v1100, 7
    %v1102 = vsub.s32 3, %v1101
    %v1103 = vrot.slane %v1093, %v1102
    %v1104 = vlaneseq
    %v1105 = vshrl.u32 %v1104, 7
    %v1106 = vsub.s32 3, %v1105
    %v1107 = vrot.slane %v1097, %v1106
    %v1108 = vmul.f32 %v964, %v1103
    %v1109 = vmul.f32 %v964, %v1107
    %v1110 = vmul.f32 %v968, %v1103
    %v1111 = vmul.f32 %v968, %v1107
    %v1112 = vmul.f32 %v972, %v1103
    %v1113 = vmul.f32 %v972, %v1107
    %v1114 = vmul.f32 %v976, %v1103
    %v1115 = vmul.f32 %v976, %v1107
    %v1116 = vmul.f32 %v980, %v1103
    %v1117 = vmul.f32 %v980, %v1107
    %v1118 = vmul.f32 %v984, %v1103
    %v1119 = vmul.f32 %v984, %v1107
    %v1120 = vmul.f32 %v988, %v1103
    %v1121 = vmul.f32 %v988, %v1107
    %v1122 = vmul.f32 %v992, %v1103
    %v1123 = vmul.f32 %v992, %v1107
    %v1124 = vmul.f32 %v996, %v1103
    %v1125 = vmul.f32 %v996, %v1107
    %v1126 = vmul.f32 %v1000, %v1103
    %v1127 = vmul.f32 %v1000, %v1107
    %v1128 = vmul.f32 %v1004, %v1103
    %v1129 = vmul.f32 %v1004, %v1107
    %v1130 = vmul.f32 %v1008, %v1103
    %v1131 = vmul.f32 %v1008, %v1107
    %v1132 = vmul.f32 %v1012, %v1103
    %v1133 = vmul.f32 %v1012, %v1107
    %v1134 = vmul.f32 %v1016, %v1103
    %v1135 = vmul.f32 %v1016, %v1107
    %v1136 = vmul.f32 %v1020, %v1103
    %v1137 = vmul.f32 %v1020, %v1107
    %v1138 = vmul.f32 %v1024, %v1103
    %v1139 = vmul.f32 %v1024, %v1107
    %v1140 = vmul.f32 %v1028, %v1103
    %v1141 = vmul.f32 %v1028, %v1107
    %v1142 = vmul.f32 %v1032, %v1103
    %v1143 = vmul.f32 %v1032, %v1107
    %v1144 = vmul.f32 %v1036, %v1103
    %v1145 = vmul.f32 %v1036, %v1107
    %v1146 = vmul.f32 %v1040, %v1103
    %v1147 = vmul.f32 %v1040, %v1107
    %v1148 = vmul.f32 %v1044, %v1103
    %v1149 = vmul.f32 %v1044, %v1107
    %v1150 = vmul.f32 %v1048, %v1103
    %v1151 = vmul.f32 %v1048, %v1107
    %v1152 = vmul.f32 %v1052, %v1103
    %v1153 = vmul.f32 %v1052, %v1107
    %v1154 = vmul.f32 %v1056, %v1103
    %v1155 = vmul.f32 %v1056, %v1107
    %v1156 = vmul.f32 %v1060, %v1103
    %v1157 = vmul.f32 %v1060, %v1107
    %v1158 = vmul.f32 %v1064, %v1103
    %v1159 = vmul.f32 %v1064, %v1107
    %v1160 = vmul.f32 %v1068, %v1103
    %v1161 = vmul.f32 %v1068, %v1107
    %v1162 = vmul.f32 %v1072, %v1103
    %v1163 = vmul.f32 %v1072, %v1107
    %v1164 = vmul.f32 %v1076, %v1103
    %v1165 = vmul.f32 %v1076, %v1107
    %v1166 = vmul.f32 %v1080, %v1103
    %v1167 = vmul.f32 %v1080, %v1107
    %v1168 = vmul.f32 %v1084, %v1103
    %v1169 = vmul.f32 %v1084, %v1107
    %v1170 = vmul.f32 %v1088, %v1103
    %v1171 = vmul.f32 %v1088, %v1107
    %v1172 = vadd.f32 %v898, %v1108
    %v1173 = vadd.f32 %v899, %v1109
    %v1174 = vadd.f32 %v900, %v1110
    %v1175 = vadd.f32 %v901, %v1111
    %v1176 = vadd.f32 %v902, %v1112
    %v1177 = vadd.f32 %v903, %v1113
    %v1178 = vadd.f32 %v904, %v1114
    %v1179 = vadd.f32 %v905, %v1115
    %v1180 = vadd.f32 %v906, %v1116
    %v1181 = vadd.f32 %v907, %v1117
    %v1182 = vadd.f32 %v908, %v1118
    %v1183 = vadd.f32 %v909, %v1119
    %v1184 = vadd.f32 %v910, %v1120
    %v1185 = vadd.f32 %v911, %v1121
    %v1186 = vadd.f32 %v912, %v1122
    %v1187 = vadd.f32 %v913, %v1123
    %v1188 = vadd.f32 %v914, %v1124
    %v1189 = vadd.f32 %v915, %v1125
    %v1190 = vadd.f32 %v916, %v1126
    %v1191 = vadd.f32 %v917, %v1127
    %v1192 = vadd.f32 %v918, %v1128
    %v1193 = vadd.f32 %v919, %v1129
    %v1194 = vadd.f32 %v920, %v1130
    %v1195 = vadd.f32 %v921, %v1131
    %v1196 = vadd.f32 %v922, %v1132
    %v1197 = vadd.f32 %v923, %v1133
    %v1198 = vadd.f32 %v924, %v1134
    %v1199 = vadd.f32 %v925, %v1135
    %v1200 = vadd.f32 %v926, %v1136
    %v1201 = vadd.f32 %v927, %v1137
    %v1202 = vadd.f32 %v928, %v1138
    %v1203 = vadd.f32 %v929, %v1139
    %v1204 = vadd.f32 %v930, %v1140
    %v1205 = vadd.f32 %v931, %v1141
    %v1206 = vadd.f32 %v932, %v1142
    %v1207 = vadd.f32 %v933, %v1143
    %v1208 = vadd.f32 %v934, %v1144
    %v1209 = vadd.f32 %v935, %v1145
    %v1210 = vadd.f32 %v936, %v1146
    %v1211 = vadd.f32 %v937, %v1147
    %v1212 = vadd.f32 %v938, %v1148
    %v1213 = vadd.f32 %v939, %v1149
    %v1214 = vadd.f32 %v940, %v1150
    %v1215 = vadd.f32 %v941, %v1151
    %v1216 = vadd.f32 %v942, %v1152
    %v1217 = vadd.f32 %v943, %v1153
    %v1218 = vadd.f32 %v944, %v1154
    %v1219 = vadd.f32 %v945, %v1155
    %v1220 = vadd.f32 %v946, %v1156
    %v1221 = vadd.f32 %v947, %v1157
    %v1222 = vadd.f32 %v948, %v1158
    %v1223 = vadd.f32 %v949, %v1159
    %v1224 = vadd.f32 %v950, %v1160
    %v1225 = vadd.f32 %v951, %v1161
    %v1226 = vadd.f32 %v952, %v1162
    %v1227 = vadd.f32 %v953, %v1163
    %v1228 = vadd.f32 %v954, %v1164
    %v1229 = vadd.f32 %v955, %v1165
    %v1230 = vadd.f32 %v956, %v1166
    %v1231 = vadd.f32 %v957, %v1167
    %v1232 = vadd.f32 %v958, %v1168
    %v1233 = vadd.f32 %v959, %v1169
    %v1234 = vadd.f32 %v960, %v1170
    %v1235 = vadd.f32 %v961, %v1171
    %v1236 = vmax.f32 %v1172, 0.0
    %v1237 = vmax.f32 %v1173, 0.0
    %v1238 = vmax.f32 %v1174, 0.0
    %v1239 = vmax.f32 %v1175, 0.0
    %v1240 = vmax.f32 %v1176, 0.0
    %v1241 = vmax.f32 %v1177, 0.0
    %v1242 = vmax.f32 %v1178, 0.0
    %v1243 = vmax.f32 %v1179, 0.0
    %v1244 = vmax.f32 %v1180, 0.0
    %v1245 = vmax.f32 %v1181, 0.0
    %v1246 = vmax.f32 %v1182, 0.0
    %v1247 = vmax.f32 %v1183, 0.0
    %v1248 = vmax.f32 %v1184, 0.0
    %v1249 = vmax.f32 %v1185, 0.0
    %v1250 = vmax.f32 %v1186, 0.0
    %v1251 = vmax.f32 %v1187, 0.0
    %v1252 = vmax.f32 %v1188, 0.0
    %v1253 = vmax.f32 %v1189, 0.0
    %v1254 = vmax.f32 %v1190, 0.0
    %v1255 = vmax.f32 %v1191, 0.0
    %v1256 = vmax.f32 %v1192, 0.0
    %v1257 = vmax.f32 %v1193, 0.0
    %v1258 = vmax.f32 %v1194, 0.0
    %v1259 = vmax.f32 %v1195, 0.0
    %v1260 = vmax.f32 %v1196, 0.0
    %v1261 = vmax.f32 %v1197, 0.0
    %v1262 = vmax.f32 %v1198, 0.0
    %v1263 = vmax.f32 %v1199, 0.0
    %v1264 = vmax.f32 %v1200, 0.0
    %v1265 = vmax.f32 %v1201, 0.0
    %v1266 = vmax.f32 %v1202, 0.0
    %v1267 = vmax.f32 %v1203, 0.0
    %v1268 = vmax.f32 %v1204, 0.0
    %v1269 = vmax.f32 %v1205, 0.0
    %v1270 = vmax.f32 %v1206, 0.0
    %v1271 = vmax.f32 %v1207, 0.0
    %v1272 = vmax.f32 %v1208, 0.0
    %v1273 = vmax.f32 %v1209, 0.0
    %v1274 = vmax.f32 %v1210, 0.0
    %v1275 = vmax.f32 %v1211, 0.0
    %v1276 = vmax.f32 %v1212, 0.0
    %v1277 = vmax.f32 %v1213, 0.0
    %v1278 = vmax.f32 %v1214, 0.0
    %v1279 = vmax.f32 %v1215, 0.0
    %v1280 = vmax.f32 %v1216, 0.0
    %v1281 = vmax.f32 %v1217, 0.0
    %v1282 = vmax.f32 %v1218, 0.0
    %v1283 = vmax.f32 %v1219, 0.0
    %v1284 = vmax.f32 %v1220, 0.0
    %v1285 = vmax.f32 %v1221, 0.0
    %v1286 = vmax.f32 %v1222, 0.0
    %v1287 = vmax.f32 %v1223, 0.0
    %v1288 = vmax.f32 %v1224, 0.0
    %v1289 = vmax.f32 %v1225, 0.0
    %v1290 = vmax.f32 %v1226, 0.0
    %v1291 = vmax.f32 %v1227, 0.0
    %v1292 = vmax.f32 %v1228, 0.0
    %v1293 = vmax.f32 %v1229, 0.0
    %v1294 = vmax.f32 %v1230, 0.0
    %v1295 = vmax.f32 %v1231, 0.0
    %v1296 = vmax.f32 %v1232, 0.0
    %v1297 = vmax.f32 %v1233, 0.0
    %v1298 = vmax.f32 %v1234, 0.0
    %v1299 = vmax.f32 %v1235, 0.0
    %v1300 = vpack.c.bf16 %v1238, %v1236
    %v1301 = vpack.c.bf16 %v1239, %v1237
    %v1302 = vpack.c.bf16 %v1242, %v1240
    %v1303 = vpack.c.bf16 %v1243, %v1241
    %v1304 = vpack.c.bf16 %v1246, %v1244
    %v1305 = vpack.c.bf16 %v1247, %v1245
    %v1306 = vpack.c.bf16 %v1250, %v1248
    %v1307 = vpack.c.bf16 %v1251, %v1249
    %v1308 = vpack.c.bf16 %v1254, %v1252
    %v1309 = vpack.c.bf16 %v1255, %v1253
    %v1310 = vpack.c.bf16 %v1258, %v1256
    %v1311 = vpack.c.bf16 %v1259, %v1257
    %v1312 = vpack.c.bf16 %v1262, %v1260
    %v1313 = vpack.c.bf16 %v1263, %v1261
    %v1314 = vpack.c.bf16 %v1266, %v1264
    %v1315 = vpack.c.bf16 %v1267, %v1265
    %v1316 = vpack.c.bf16 %v1270, %v1268
    %v1317 = vpack.c.bf16 %v1271, %v1269
    %v1318 = vpack.c.bf16 %v1274, %v1272
    %v1319 = vpack.c.bf16 %v1275, %v1273
    %v1320 = vpack.c.bf16 %v1278, %v1276
    %v1321 = vpack.c.bf16 %v1279, %v1277
    %v1322 = vpack.c.bf16 %v1282, %v1280
    %v1323 = vpack.c.bf16 %v1283, %v1281
    %v1324 = vpack.c.bf16 %v1286, %v1284
    %v1325 = vpack.c.bf16 %v1287, %v1285
    %v1326 = vpack.c.bf16 %v1290, %v1288
    %v1327 = vpack.c.bf16 %v1291, %v1289
    %v1328 = vpack.c.bf16 %v1294, %v1292
    %v1329 = vpack.c.bf16 %v1295, %v1293
    %v1330 = vpack.c.bf16 %v1298, %v1296
    %v1331 = vpack.c.bf16 %v1299, %v1297
    %v1332 = vld [vmem:[%s3] sm:$0xff]
    %v1333 = vld [vmem:[%s3 + $0x8] sm:$0xff]
    %v1334 = vld [vmem:[%s3 + $0x10] sm:$0xff]
    %v1335 = vld [vmem:[%s3 + $0x18] sm:$0xff]
    %v1336 = vld [vmem:[%s3 + $0x20] sm:$0xff]
    %v1337 = vld [vmem:[%s3 + $0x28] sm:$0xff]
    %v1338 = vld [vmem:[%s3 + $0x30] sm:$0xff]
    %v1339 = vld [vmem:[%s3 + $0x38] sm:$0xff]
    %v1340 = vld [vmem:[%s3 + $0x40] sm:$0xff]
    %v1341 = vld [vmem:[%s3 + $0x48] sm:$0xff]
    %v1342 = vld [vmem:[%s3 + $0x50] sm:$0xff]
    %v1343 = vld [vmem:[%s3 + $0x58] sm:$0xff]
    %v1344 = vld [vmem:[%s3 + $0x60] sm:$0xff]
    %v1345 = vld [vmem:[%s3 + $0x68] sm:$0xff]
    %v1346 = vld [vmem:[%s3 + $0x70] sm:$0xff]
    %v1347 = vld [vmem:[%s3 + $0x78] sm:$0xff]
    %v1348 = vld [vmem:[%s3 + $0x80] sm:$0xff]
    %v1349 = vld [vmem:[%s3 + $0x88] sm:$0xff]
    %v1350 = vld [vmem:[%s3 + $0x90] sm:$0xff]
    %v1351 = vld [vmem:[%s3 + $0x98] sm:$0xff]
    %v1352 = vld [vmem:[%s3 + $0xa0] sm:$0xff]
    %v1353 = vld [vmem:[%s3 + $0xa8] sm:$0xff]
    %v1354 = vld [vmem:[%s3 + $0xb0] sm:$0xff]
    %v1355 = vld [vmem:[%s3 + $0xb8] sm:$0xff]
    %v1356 = vld [vmem:[%s3 + $0xc0] sm:$0xff]
    %v1357 = vld [vmem:[%s3 + $0xc8] sm:$0xff]
    %v1358 = vld [vmem:[%s3 + $0xd0] sm:$0xff]
    %v1359 = vld [vmem:[%s3 + $0xd8] sm:$0xff]
    %v1360 = vld [vmem:[%s3 + $0xe0] sm:$0xff]
    %v1361 = vld [vmem:[%s3 + $0xe8] sm:$0xff]
    %v1362 = vld [vmem:[%s3 + $0xf0] sm:$0xff]
    %v1363 = vld [vmem:[%s3 + $0xf8] sm:$0xff]
    %v1364 = vld [vmem:[%s4] sm:$0x3]
    %v1366 = vlaneseq
    %v1367 = vshrl.u32 %v1366, 7
    %v1368 = vsub.s32 0, %v1367
    %v1369 = vrot.slane %v1364, %v1368
    %v1370 = vlaneseq
    %v1371 = vshrl.u32 %v1370, 7
    %v1372 = vsub.s32 1, %v1371
    %v1373 = vrot.slane %v1364, %v1372
    %v1408 = vunpack.c.l.b16 %v1332
    %v1409 = vunpack.c.h.b16 %v1332
    %v1410 = vunpack.c.l.b16 %v1333
    %v1411 = vunpack.c.h.b16 %v1333
    %v1412 = vunpack.c.l.b16 %v1334
    %v1413 = vunpack.c.h.b16 %v1334
    %v1414 = vunpack.c.l.b16 %v1335
    %v1415 = vunpack.c.h.b16 %v1335
    %v1416 = vunpack.c.l.b16 %v1336
    %v1417 = vunpack.c.h.b16 %v1336
    %v1418 = vunpack.c.l.b16 %v1337
    %v1419 = vunpack.c.h.b16 %v1337
    %v1420 = vunpack.c.l.b16 %v1338
    %v1421 = vunpack.c.h.b16 %v1338
    %v1422 = vunpack.c.l.b16 %v1339
    %v1423 = vunpack.c.h.b16 %v1339
    %v1424 = vunpack.c.l.b16 %v1340
    %v1425 = vunpack.c.h.b16 %v1340
    %v1426 = vunpack.c.l.b16 %v1341
    %v1427 = vunpack.c.h.b16 %v1341
    %v1428 = vunpack.c.l.b16 %v1342
    %v1429 = vunpack.c.h.b16 %v1342
    %v1430 = vunpack.c.l.b16 %v1343
    %v1431 = vunpack.c.h.b16 %v1343
    %v1432 = vunpack.c.l.b16 %v1344
    %v1433 = vunpack.c.h.b16 %v1344
    %v1434 = vunpack.c.l.b16 %v1345
    %v1435 = vunpack.c.h.b16 %v1345
    %v1436 = vunpack.c.l.b16 %v1346
    %v1437 = vunpack.c.h.b16 %v1346
    %v1438 = vunpack.c.l.b16 %v1347
    %v1439 = vunpack.c.h.b16 %v1347
    %v1440 = vunpack.c.l.b16 %v1348
    %v1441 = vunpack.c.h.b16 %v1348
    %v1442 = vunpack.c.l.b16 %v1349
    %v1443 = vunpack.c.h.b16 %v1349
    %v1444 = vunpack.c.l.b16 %v1350
    %v1445 = vunpack.c.h.b16 %v1350
    %v1446 = vunpack.c.l.b16 %v1351
    %v1447 = vunpack.c.h.b16 %v1351
    %v1448 = vunpack.c.l.b16 %v1352
    %v1449 = vunpack.c.h.b16 %v1352
    %v1450 = vunpack.c.l.b16 %v1353
    %v1451 = vunpack.c.h.b16 %v1353
    %v1452 = vunpack.c.l.b16 %v1354
    %v1453 = vunpack.c.h.b16 %v1354
    %v1454 = vunpack.c.l.b16 %v1355
    %v1455 = vunpack.c.h.b16 %v1355
    %v1456 = vunpack.c.l.b16 %v1356
    %v1457 = vunpack.c.h.b16 %v1356
    %v1458 = vunpack.c.l.b16 %v1357
    %v1459 = vunpack.c.h.b16 %v1357
    %v1460 = vunpack.c.l.b16 %v1358
    %v1461 = vunpack.c.h.b16 %v1358
    %v1462 = vunpack.c.l.b16 %v1359
    %v1463 = vunpack.c.h.b16 %v1359
    %v1464 = vunpack.c.l.b16 %v1360
    %v1465 = vunpack.c.h.b16 %v1360
    %v1466 = vunpack.c.l.b16 %v1361
    %v1467 = vunpack.c.h.b16 %v1361
    %v1468 = vunpack.c.l.b16 %v1362
    %v1469 = vunpack.c.h.b16 %v1362
    %v1470 = vunpack.c.l.b16 %v1363
    %v1471 = vunpack.c.h.b16 %v1363
    %v1472 = vpack.c.b16 %v1410, %v1408
    %v1473 = vpack.c.b16 %v1411, %v1409
    %v1474 = vpack.c.b16 %v1414, %v1412
    %v1475 = vpack.c.b16 %v1415, %v1413
    %v1476 = vpack.c.b16 %v1418, %v1416
    %v1477 = vpack.c.b16 %v1419, %v1417
    %v1478 = vpack.c.b16 %v1422, %v1420
    %v1479 = vpack.c.b16 %v1423, %v1421
    %v1480 = vpack.c.b16 %v1426, %v1424
    %v1481 = vpack.c.b16 %v1427, %v1425
    %v1482 = vpack.c.b16 %v1430, %v1428
    %v1483 = vpack.c.b16 %v1431, %v1429
    %v1484 = vpack.c.b16 %v1434, %v1432
    %v1485 = vpack.c.b16 %v1435, %v1433
    %v1486 = vpack.c.b16 %v1438, %v1436
    %v1487 = vpack.c.b16 %v1439, %v1437
    %v1488 = vpack.c.b16 %v1442, %v1440
    %v1489 = vpack.c.b16 %v1443, %v1441
    %v1490 = vpack.c.b16 %v1446, %v1444
    %v1491 = vpack.c.b16 %v1447, %v1445
    %v1492 = vpack.c.b16 %v1450, %v1448
    %v1493 = vpack.c.b16 %v1451, %v1449
    %v1494 = vpack.c.b16 %v1454, %v1452
    %v1495 = vpack.c.b16 %v1455, %v1453
    %v1496 = vpack.c.b16 %v1458, %v1456
    %v1497 = vpack.c.b16 %v1459, %v1457
    %v1498 = vpack.c.b16 %v1462, %v1460
    %v1499 = vpack.c.b16 %v1463, %v1461
    %v1500 = vpack.c.b16 %v1466, %v1464
    %v1501 = vpack.c.b16 %v1467, %v1465
    %v1502 = vpack.c.b16 %v1470, %v1468
    %v1503 = vpack.c.b16 %v1471, %v1469
    %1536 = vmatprep.subr.bf16.mxu0 %v1473
    %1537 = vmatpush1.bf16.msra.mxu0 %v1472
    %1538 = vmatprep.subr.bf16.mxu0 %v1475
    %1539 = vmatpush1.bf16.msra.mxu0 %v1474
    %1540 = vmatprep.subr.bf16.mxu0 %v1477
    %1541 = vmatpush1.bf16.msra.mxu0 %v1476
    %1542 = vmatprep.subr.bf16.mxu0 %v1479
    %1543 = vmatpush1.bf16.msra.mxu0 %v1478
    %1544 = vmatprep.subr.bf16.mxu0 %v1481
    %1545 = vmatpush1.bf16.msra.mxu0 %v1480
    %1546 = vmatprep.subr.bf16.mxu0 %v1483
    %1547 = vmatpush1.bf16.msra.mxu0 %v1482
    %1548 = vmatprep.subr.bf16.mxu0 %v1485
    %1549 = vmatpush1.bf16.msra.mxu0 %v1484
    %1550 = vmatprep.subr.bf16.mxu0 %v1487
    %1551 = vmatpush1.bf16.msra.mxu0 %v1486
    %1552 = vmatprep.subr.bf16.mxu0 %v1489
    %1553 = vmatpush1.bf16.msra.mxu0 %v1488
    %1554 = vmatprep.subr.bf16.mxu0 %v1491
    %1555 = vmatpush1.bf16.msra.mxu0 %v1490
    %1556 = vmatprep.subr.bf16.mxu0 %v1493
    %1557 = vmatpush1.bf16.msra.mxu0 %v1492
    %1558 = vmatprep.subr.bf16.mxu0 %v1495
    %1559 = vmatpush1.bf16.msra.mxu0 %v1494
    %1560 = vmatprep.subr.bf16.mxu0 %v1497
    %1561 = vmatpush1.bf16.msra.mxu0 %v1496
    %1562 = vmatprep.subr.bf16.mxu0 %v1499
    %1563 = vmatpush1.bf16.msra.mxu0 %v1498
    %1564 = vmatprep.subr.bf16.mxu0 %v1501
    %1565 = vmatpush1.bf16.msra.mxu0 %v1500
    %1566 = vmatprep.subr.bf16.mxu0 %v1503
    %1567 = vmatpush1.bf16.msra.mxu0 %v1502
    %1568 = vmatprep.mubr.bf16.mxu0 %v1301
    %1569 = vmatmul.mubr.bf16.gmra.mrb[0].mxu0 %v1300
    %v1570 = vpop.f32.mrb[0].mxu0
    %v1571 = vadd.f32 %v1369, %v1570
    %v1572 = vpop.f32.mrb[0].mxu0
    %v1573 = vadd.f32 %v1373, %v1572
    %v1574 = vpop.f32.mrb[0].mxu0
    %v1575 = vadd.f32 %v1369, %v1574
    %v1576 = vpop.f32.mrb[0].mxu0
    %v1577 = vadd.f32 %v1373, %v1576
    %1578 = vmatprep.mubr.bf16.mxu0 %v1303
    %1579 = vmatmul.mubr.bf16.gmra.mrb[0].mxu0 %v1302
    %v1580 = vpop.f32.mrb[0].mxu0
    %v1581 = vadd.f32 %v1369, %v1580
    %v1582 = vpop.f32.mrb[0].mxu0
    %v1583 = vadd.f32 %v1373, %v1582
    %v1584 = vpop.f32.mrb[0].mxu0
    %v1585 = vadd.f32 %v1369, %v1584
    %v1586 = vpop.f32.mrb[0].mxu0
    %v1587 = vadd.f32 %v1373, %v1586
    %1588 = vmatprep.mubr.bf16.mxu0 %v1305
    %1589 = vmatmul.mubr.bf16.gmra.mrb[0].mxu0 %v1304
    %v1590 = vpop.f32.mrb[0].mxu0
    %v1591 = vadd.f32 %v1369, %v1590
    %v1592 = vpop.f32.mrb[0].mxu0
    %v1593 = vadd.f32 %v1373, %v1592
    %v1594 = vpop.f32.mrb[0].mxu0
    %v1595 = vadd.f32 %v1369, %v1594
    %v1596 = vpop.f32.mrb[0].mxu0
    %v1597 = vadd.f32 %v1373, %v1596
    %1598 = vmatprep.mubr.bf16.mxu0 %v1307
    %1599 = vmatmul.mubr.bf16.gmra.mrb[0].mxu0 %v1306
    %v1600 = vpop.f32.mrb[0].mxu0
    %v1601 = vadd.f32 %v1369, %v1600
    %v1602 = vpop.f32.mrb[0].mxu0
    %v1603 = vadd.f32 %v1373, %v1602
    %v1604 = vpop.f32.mrb[0].mxu0
    %v1605 = vadd.f32 %v1369, %v1604
    %v1606 = vpop.f32.mrb[0].mxu0
    %v1607 = vadd.f32 %v1373, %v1606
    %1608 = vmatprep.mubr.bf16.mxu0 %v1309
    %1609 = vmatmul.mubr.bf16.gmra.mrb[0].mxu0 %v1308
    %v1610 = vpop.f32.mrb[0].mxu0
    %v1611 = vadd.f32 %v1369, %v1610
    %v1612 = vpop.f32.mrb[0].mxu0
    %v1613 = vadd.f32 %v1373, %v1612
    %v1614 = vpop.f32.mrb[0].mxu0
    %v1615 = vadd.f32 %v1369, %v1614
    %v1616 = vpop.f32.mrb[0].mxu0
    %v1617 = vadd.f32 %v1373, %v1616
    %1618 = vmatprep.mubr.bf16.mxu0 %v1311
    %1619 = vmatmul.mubr.bf16.gmra.mrb[0].mxu0 %v1310
    %v1620 = vpop.f32.mrb[0].mxu0
    %v1621 = vadd.f32 %v1369, %v1620
    %v1622 = vpop.f32.mrb[0].mxu0
    %v1623 = vadd.f32 %v1373, %v1622
    %v1624 = vpop.f32.mrb[0].mxu0
    %v1625 = vadd.f32 %v1369, %v1624
    %v1626 = vpop.f32.mrb[0].mxu0
    %v1627 = vadd.f32 %v1373, %v1626
    %1628 = vmatprep.mubr.bf16.mxu0 %v1313
    %1629 = vmatmul.mubr.bf16.gmra.mrb[0].mxu0 %v1312
    %v1630 = vpop.f32.mrb[0].mxu0
    %v1631 = vadd.f32 %v1369, %v1630
    %v1632 = vpop.f32.mrb[0].mxu0
    %v1633 = vadd.f32 %v1373, %v1632
    %v1634 = vpop.f32.mrb[0].mxu0
    %v1635 = vadd.f32 %v1369, %v1634
    %v1636 = vpop.f32.mrb[0].mxu0
    %v1637 = vadd.f32 %v1373, %v1636
    %1638 = vmatprep.mubr.bf16.mxu0 %v1315
    %1639 = vmatmul.mubr.bf16.gmra.mrb[0].mxu0 %v1314
    %v1640 = vpop.f32.mrb[0].mxu0
    %v1641 = vadd.f32 %v1369, %v1640
    %v1642 = vpop.f32.mrb[0].mxu0
    %v1643 = vadd.f32 %v1373, %v1642
    %v1644 = vpop.f32.mrb[0].mxu0
    %v1645 = vadd.f32 %v1369, %v1644
    %v1646 = vpop.f32.mrb[0].mxu0
    %v1647 = vadd.f32 %v1373, %v1646
    %1648 = vmatprep.mubr.bf16.mxu0 %v1317
    %1649 = vmatmul.mubr.bf16.gmra.mrb[0].mxu0 %v1316
    %v1650 = vpop.f32.mrb[0].mxu0
    %v1651 = vadd.f32 %v1369, %v1650
    %v1652 = vpop.f32.mrb[0].mxu0
    %v1653 = vadd.f32 %v1373, %v1652
    %v1654 = vpop.f32.mrb[0].mxu0
    %v1655 = vadd.f32 %v1369, %v1654
    %v1656 = vpop.f32.mrb[0].mxu0
    %v1657 = vadd.f32 %v1373, %v1656
    %1658 = vmatprep.mubr.bf16.mxu0 %v1319
    %1659 = vmatmul.mubr.bf16.gmra.mrb[0].mxu0 %v1318
    %v1660 = vpop.f32.mrb[0].mxu0
    %v1661 = vadd.f32 %v1369, %v1660
    %v1662 = vpop.f32.mrb[0].mxu0
    %v1663 = vadd.f32 %v1373, %v1662
    %v1664 = vpop.f32.mrb[0].mxu0
    %v1665 = vadd.f32 %v1369, %v1664
    %v1666 = vpop.f32.mrb[0].mxu0
    %v1667 = vadd.f32 %v1373, %v1666
    %1668 = vmatprep.mubr.bf16.mxu0 %v1321
    %1669 = vmatmul.mubr.bf16.gmra.mrb[0].mxu0 %v1320
    %v1670 = vpop.f32.mrb[0].mxu0
    %v1671 = vadd.f32 %v1369, %v1670
    %v1672 = vpop.f32.mrb[0].mxu0
    %v1673 = vadd.f32 %v1373, %v1672
    %v1674 = vpop.f32.mrb[0].mxu0
    %v1675 = vadd.f32 %v1369, %v1674
    %v1676 = vpop.f32.mrb[0].mxu0
    %v1677 = vadd.f32 %v1373, %v1676
    %1678 = vmatprep.mubr.bf16.mxu0 %v1323
    %1679 = vmatmul.mubr.bf16.gmra.mrb[0].mxu0 %v1322
    %v1680 = vpop.f32.mrb[0].mxu0
    %v1681 = vadd.f32 %v1369, %v1680
    %v1682 = vpop.f32.mrb[0].mxu0
    %v1683 = vadd.f32 %v1373, %v1682
    %v1684 = vpop.f32.mrb[0].mxu0
    %v1685 = vadd.f32 %v1369, %v1684
    %v1686 = vpop.f32.mrb[0].mxu0
    %v1687 = vadd.f32 %v1373, %v1686
    %1688 = vmatprep.mubr.bf16.mxu0 %v1325
    %1689 = vmatmul.mubr.bf16.gmra.mrb[0].mxu0 %v1324
    %v1690 = vpop.f32.mrb[0].mxu0
    %v1691 = vadd.f32 %v1369, %v1690
    %v1692 = vpop.f32.mrb[0].mxu0
    %v1693 = vadd.f32 %v1373, %v1692
    %v1694 = vpop.f32.mrb[0].mxu0
    %v1695 = vadd.f32 %v1369, %v1694
    %v1696 = vpop.f32.mrb[0].mxu0
    %v1697 = vadd.f32 %v1373, %v1696
    %1698 = vmatprep.mubr.bf16.mxu0 %v1327
    %1699 = vmatmul.mubr.bf16.gmra.mrb[0].mxu0 %v1326
    %v1700 = vpop.f32.mrb[0].mxu0
    %v1701 = vadd.f32 %v1369, %v1700
    %v1702 = vpop.f32.mrb[0].mxu0
    %v1703 = vadd.f32 %v1373, %v1702
    %v1704 = vpop.f32.mrb[0].mxu0
    %v1705 = vadd.f32 %v1369, %v1704
    %v1706 = vpop.f32.mrb[0].mxu0
    %v1707 = vadd.f32 %v1373, %v1706
    %1708 = vmatprep.mubr.bf16.mxu0 %v1329
    %1709 = vmatmul.mubr.bf16.gmra.mrb[0].mxu0 %v1328
    %v1710 = vpop.f32.mrb[0].mxu0
    %v1711 = vadd.f32 %v1369, %v1710
    %v1712 = vpop.f32.mrb[0].mxu0
    %v1713 = vadd.f32 %v1373, %v1712
    %v1714 = vpop.f32.mrb[0].mxu0
    %v1715 = vadd.f32 %v1369, %v1714
    %v1716 = vpop.f32.mrb[0].mxu0
    %v1717 = vadd.f32 %v1373, %v1716
    %1718 = vmatprep.mubr.bf16.mxu0 %v1331
    %1719 = vmatmul.mubr.bf16.gmra.mrb[0].mxu0 %v1330
    %v1720 = vpop.f32.mrb[0].mxu0
    %v1721 = vadd.f32 %v1369, %v1720
    %v1722 = vpop.f32.mrb[0].mxu0
    %v1723 = vadd.f32 %v1373, %v1722
    %v1724 = vpop.f32.mrb[0].mxu0
    %v1725 = vadd.f32 %v1369, %v1724
    %v1726 = vpop.f32.mrb[0].mxu0
    %v1727 = vadd.f32 %v1373, %v1726
    %1728 = vdwg.mxu0
    %v1729 = vmax.f32 %v1571, 0.0
    %v1730 = vmax.f32 %v1573, 0.0
    %v1731 = vmax.f32 %v1575, 0.0
    %v1732 = vmax.f32 %v1577, 0.0
    %v1733 = vmax.f32 %v1581, 0.0
    %v1734 = vmax.f32 %v1583, 0.0
    %v1735 = vmax.f32 %v1585, 0.0
    %v1736 = vmax.f32 %v1587, 0.0
    %v1737 = vmax.f32 %v1591, 0.0
    %v1738 = vmax.f32 %v1593, 0.0
    %v1739 = vmax.f32 %v1595, 0.0
    %v1740 = vmax.f32 %v1597, 0.0
    %v1741 = vmax.f32 %v1601, 0.0
    %v1742 = vmax.f32 %v1603, 0.0
    %v1743 = vmax.f32 %v1605, 0.0
    %v1744 = vmax.f32 %v1607, 0.0
    %v1745 = vmax.f32 %v1611, 0.0
    %v1746 = vmax.f32 %v1613, 0.0
    %v1747 = vmax.f32 %v1615, 0.0
    %v1748 = vmax.f32 %v1617, 0.0
    %v1749 = vmax.f32 %v1621, 0.0
    %v1750 = vmax.f32 %v1623, 0.0
    %v1751 = vmax.f32 %v1625, 0.0
    %v1752 = vmax.f32 %v1627, 0.0
    %v1753 = vmax.f32 %v1631, 0.0
    %v1754 = vmax.f32 %v1633, 0.0
    %v1755 = vmax.f32 %v1635, 0.0
    %v1756 = vmax.f32 %v1637, 0.0
    %v1757 = vmax.f32 %v1641, 0.0
    %v1758 = vmax.f32 %v1643, 0.0
    %v1759 = vmax.f32 %v1645, 0.0
    %v1760 = vmax.f32 %v1647, 0.0
    %v1761 = vmax.f32 %v1651, 0.0
    %v1762 = vmax.f32 %v1653, 0.0
    %v1763 = vmax.f32 %v1655, 0.0
    %v1764 = vmax.f32 %v1657, 0.0
    %v1765 = vmax.f32 %v1661, 0.0
    %v1766 = vmax.f32 %v1663, 0.0
    %v1767 = vmax.f32 %v1665, 0.0
    %v1768 = vmax.f32 %v1667, 0.0
    %v1769 = vmax.f32 %v1671, 0.0
    %v1770 = vmax.f32 %v1673, 0.0
    %v1771 = vmax.f32 %v1675, 0.0
    %v1772 = vmax.f32 %v1677, 0.0
    %v1773 = vmax.f32 %v1681, 0.0
    %v1774 = vmax.f32 %v1683, 0.0
    %v1775 = vmax.f32 %v1685, 0.0
    %v1776 = vmax.f32 %v1687, 0.0
    %v1777 = vmax.f32 %v1691, 0.0
    %v1778 = vmax.f32 %v1693, 0.0
    %v1779 = vmax.f32 %v1695, 0.0
    %v1780 = vmax.f32 %v1697, 0.0
    %v1781 = vmax.f32 %v1701, 0.0
    %v1782 = vmax.f32 %v1703, 0.0
    %v1783 = vmax.f32 %v1705, 0.0
    %v1784 = vmax.f32 %v1707, 0.0
    %v1785 = vmax.f32 %v1711, 0.0
    %v1786 = vmax.f32 %v1713, 0.0
    %v1787 = vmax.f32 %v1715, 0.0
    %v1788 = vmax.f32 %v1717, 0.0
    %v1789 = vmax.f32 %v1721, 0.0
    %v1790 = vmax.f32 %v1723, 0.0
    %v1791 = vmax.f32 %v1725, 0.0
    %v1792 = vmax.f32 %v1727, 0.0
    %v1793 = vpack.c.bf16 %v1731, %v1729
    %v1794 = vpack.c.bf16 %v1732, %v1730
    %v1795 = vpack.c.bf16 %v1735, %v1733
    %v1796 = vpack.c.bf16 %v1736, %v1734
    %v1797 = vpack.c.bf16 %v1739, %v1737
    %v1798 = vpack.c.bf16 %v1740, %v1738
    %v1799 = vpack.c.bf16 %v1743, %v1741
    %v1800 = vpack.c.bf16 %v1744, %v1742
    %v1801 = vpack.c.bf16 %v1747, %v1745
    %v1802 = vpack.c.bf16 %v1748, %v1746
    %v1803 = vpack.c.bf16 %v1751, %v1749
    %v1804 = vpack.c.bf16 %v1752, %v1750
    %v1805 = vpack.c.bf16 %v1755, %v1753
    %v1806 = vpack.c.bf16 %v1756, %v1754
    %v1807 = vpack.c.bf16 %v1759, %v1757
    %v1808 = vpack.c.bf16 %v1760, %v1758
    %v1809 = vpack.c.bf16 %v1763, %v1761
    %v1810 = vpack.c.bf16 %v1764, %v1762
    %v1811 = vpack.c.bf16 %v1767, %v1765
    %v1812 = vpack.c.bf16 %v1768, %v1766
    %v1813 = vpack.c.bf16 %v1771, %v1769
    %v1814 = vpack.c.bf16 %v1772, %v1770
    %v1815 = vpack.c.bf16 %v1775, %v1773
    %v1816 = vpack.c.bf16 %v1776, %v1774
    %v1817 = vpack.c.bf16 %v1779, %v1777
    %v1818 = vpack.c.bf16 %v1780, %v1778
    %v1819 = vpack.c.bf16 %v1783, %v1781
    %v1820 = vpack.c.bf16 %v1784, %v1782
    %v1821 = vpack.c.bf16 %v1787, %v1785
    %v1822 = vpack.c.bf16 %v1788, %v1786
    %v1823 = vpack.c.bf16 %v1791, %v1789
    %v1824 = vpack.c.bf16 %v1792, %v1790
    %v1825 = vld [vmem:[#allocation2] sm:$0xf]
    %v1826 = vld [vmem:[#allocation2 + $0x4] sm:$0xf]
    %v1827 = vld [vmem:[#allocation2 + $0x8] sm:$0xf]
    %v1828 = vld [vmem:[#allocation2 + $0xc] sm:$0xf]
    %v1829 = vld [vmem:[#allocation2 + $0x10] sm:$0xf]
    %v1830 = vld [vmem:[#allocation2 + $0x14] sm:$0xf]
    %v1831 = vld [vmem:[#allocation2 + $0x18] sm:$0xf]
    %v1832 = vld [vmem:[#allocation2 + $0x1c] sm:$0xf]
    %v1833 = vld [vmem:[#allocation2 + $0x20] sm:$0xf]
    %v1834 = vld [vmem:[#allocation2 + $0x24] sm:$0xf]
    %v1835 = vld [vmem:[#allocation2 + $0x28] sm:$0xf]
    %v1836 = vld [vmem:[#allocation2 + $0x2c] sm:$0xf]
    %v1837 = vld [vmem:[#allocation2 + $0x30] sm:$0xf]
    %v1838 = vld [vmem:[#allocation2 + $0x34] sm:$0xf]
    %v1839 = vld [vmem:[#allocation2 + $0x38] sm:$0xf]
    %v1840 = vld [vmem:[#allocation2 + $0x3c] sm:$0xf]
    %v1841 = vld [vmem:[#allocation2 + $0x40] sm:$0xf]
    %v1842 = vld [vmem:[#allocation2 + $0x44] sm:$0xf]
    %v1843 = vld [vmem:[#allocation2 + $0x48] sm:$0xf]
    %v1844 = vld [vmem:[#allocation2 + $0x4c] sm:$0xf]
    %v1845 = vld [vmem:[#allocation2 + $0x50] sm:$0xf]
    %v1846 = vld [vmem:[#allocation2 + $0x54] sm:$0xf]
    %v1847 = vld [vmem:[#allocation2 + $0x58] sm:$0xf]
    %v1848 = vld [vmem:[#allocation2 + $0x5c] sm:$0xf]
    %v1849 = vld [vmem:[#allocation2 + $0x60] sm:$0xf]
    %v1850 = vld [vmem:[#allocation2 + $0x64] sm:$0xf]
    %v1851 = vld [vmem:[#allocation2 + $0x68] sm:$0xf]
    %v1852 = vld [vmem:[#allocation2 + $0x6c] sm:$0xf]
    %v1853 = vld [vmem:[#allocation2 + $0x70] sm:$0xf]
    %v1854 = vld [vmem:[#allocation2 + $0x74] sm:$0xf]
    %v1855 = vld [vmem:[#allocation2 + $0x78] sm:$0xf]
    %v1856 = vld [vmem:[#allocation2 + $0x7c] sm:$0xf]
    %v1857 = vld [vmem:[%s6] sm:$0x1]
    %v1859 = vlaneseq
    %v1860 = vshrl.u32 %v1859, 7
    %v1861 = vsub.s32 0, %v1860
    %v1862 = vrot.slane %v1857, %v1861
    %v1896 = vunpack.c.l.b16 %v1825
    %v1897 = vunpack.c.l.b16 %v1826
    %v1898 = vunpack.c.l.b16 %v1827
    %v1899 = vunpack.c.l.b16 %v1828
    %v1900 = vunpack.c.l.b16 %v1829
    %v1901 = vunpack.c.l.b16 %v1830
    %v1902 = vunpack.c.l.b16 %v1831
    %v1903 = vunpack.c.l.b16 %v1832
    %v1904 = vunpack.c.l.b16 %v1833
    %v1905 = vunpack.c.l.b16 %v1834
    %v1906 = vunpack.c.l.b16 %v1835
    %v1907 = vunpack.c.l.b16 %v1836
    %v1908 = vunpack.c.l.b16 %v1837
    %v1909 = vunpack.c.l.b16 %v1838
    %v1910 = vunpack.c.l.b16 %v1839
    %v1911 = vunpack.c.l.b16 %v1840
    %v1912 = vunpack.c.l.b16 %v1841
    %v1913 = vunpack.c.l.b16 %v1842
    %v1914 = vunpack.c.l.b16 %v1843
    %v1915 = vunpack.c.l.b16 %v1844
    %v1916 = vunpack.c.l.b16 %v1845
    %v1917 = vunpack.c.l.b16 %v1846
    %v1918 = vunpack.c.l.b16 %v1847
    %v1919 = vunpack.c.l.b16 %v1848
    %v1920 = vunpack.c.l.b16 %v1849
    %v1921 = vunpack.c.l.b16 %v1850
    %v1922 = vunpack.c.l.b16 %v1851
    %v1923 = vunpack.c.l.b16 %v1852
    %v1924 = vunpack.c.l.b16 %v1853
    %v1925 = vunpack.c.l.b16 %v1854
    %v1926 = vunpack.c.l.b16 %v1855
    %v1927 = vunpack.c.l.b16 %v1856
    %v1928 = vpack.c.b16 %v1897, %v1896
    %v1929 = vpack.c.b16 %v1899, %v1898
    %v1930 = vpack.c.b16 %v1901, %v1900
    %v1931 = vpack.c.b16 %v1903, %v1902
    %v1932 = vpack.c.b16 %v1905, %v1904
    %v1933 = vpack.c.b16 %v1907, %v1906
    %v1934 = vpack.c.b16 %v1909, %v1908
    %v1935 = vpack.c.b16 %v1911, %v1910
    %v1936 = vpack.c.b16 %v1913, %v1912
    %v1937 = vpack.c.b16 %v1915, %v1914
    %v1938 = vpack.c.b16 %v1917, %v1916
    %v1939 = vpack.c.b16 %v1919, %v1918
    %v1940 = vpack.c.b16 %v1921, %v1920
    %v1941 = vpack.c.b16 %v1923, %v1922
    %v1942 = vpack.c.b16 %v1925, %v1924
    %v1943 = vpack.c.b16 %v1927, %v1926
    %1960 = vmatprep.subr.bf16.mxu0 0
    %1961 = vmatpush1.bf16.msra.mxu0 %v1928
    %1962 = vmatprep.subr.bf16.mxu0 0
    %1963 = vmatpush1.bf16.msra.mxu0 %v1929
    %1964 = vmatprep.subr.bf16.mxu0 0
    %1965 = vmatpush1.bf16.msra.mxu0 %v1930
    %1966 = vmatprep.subr.bf16.mxu0 0
    %1967 = vmatpush1.bf16.msra.mxu0 %v1931
    %1968 = vmatprep.subr.bf16.mxu0 0
    %1969 = vmatpush1.bf16.msra.mxu0 %v1932
    %1970 = vmatprep.subr.bf16.mxu0 0
    %1971 = vmatpush1.bf16.msra.mxu0 %v1933
    %1972 = vmatprep.subr.bf16.mxu0 0
    %1973 = vmatpush1.bf16.msra.mxu0 %v1934
    %1974 = vmatprep.subr.bf16.mxu0 0
    %1975 = vmatpush1.bf16.msra.mxu0 %v1935
    %1976 = vmatprep.subr.bf16.mxu0 0
    %1977 = vmatpush1.bf16.msra.mxu0 %v1936
    %1978 = vmatprep.subr.bf16.mxu0 0
    %1979 = vmatpush1.bf16.msra.mxu0 %v1937
    %1980 = vmatprep.subr.bf16.mxu0 0
    %1981 = vmatpush1.bf16.msra.mxu0 %v1938
    %1982 = vmatprep.subr.bf16.mxu0 0
    %1983 = vmatpush1.bf16.msra.mxu0 %v1939
    %1984 = vmatprep.subr.bf16.mxu0 0
    %1985 = vmatpush1.bf16.msra.mxu0 %v1940
    %1986 = vmatprep.subr.bf16.mxu0 0
    %1987 = vmatpush1.bf16.msra.mxu0 %v1941
    %1988 = vmatprep.subr.bf16.mxu0 0
    %1989 = vmatpush1.bf16.msra.mxu0 %v1942
    %1990 = vmatprep.subr.bf16.mxu0 0
    %1991 = vmatpush1.bf16.msra.mxu0 %v1943
    %1992 = vmatprep.mubr.bf16.mxu0 %v1794
    %1993 = vmatmul.mubr.bf16.gmra.mrb[0].mxu0 %v1793
    %v1994 = vpop.f32.mrb[0].mxu0
    %v1995 = vadd.f32 %v1862, %v1994
    %v1996 = vpop.f32.mrb[0].mxu0
    %v1997 = vpop.f32.mrb[0].mxu0
    %v1998 = vadd.f32 %v1862, %v1997
    %v1999 = vpop.f32.mrb[0].mxu0
    %2000 = vmatprep.mubr.bf16.mxu0 %v1796
    %2001 = vmatmul.mubr.bf16.gmra.mrb[0].mxu0 %v1795
    %v2002 = vpop.f32.mrb[0].mxu0
    %v2003 = vadd.f32 %v1862, %v2002
    %v2004 = vpop.f32.mrb[0].mxu0
    %v2005 = vpop.f32.mrb[0].mxu0
    %v2006 = vadd.f32 %v1862, %v2005
    %v2007 = vpop.f32.mrb[0].mxu0
    %2008 = vmatprep.mubr.bf16.mxu0 %v1798
    %2009 = vmatmul.mubr.bf16.gmra.mrb[0].mxu0 %v1797
    %v2010 = vpop.f32.mrb[0].mxu0
    %v2011 = vadd.f32 %v1862, %v2010
    %v2012 = vpop.f32.mrb[0].mxu0
    %v2013 = vpop.f32.mrb[0].mxu0
    %v2014 = vadd.f32 %v1862, %v2013
    %v2015 = vpop.f32.mrb[0].mxu0
    %2016 = vmatprep.mubr.bf16.mxu0 %v1800
    %2017 = vmatmul.mubr.bf16.gmra.mrb[0].mxu0 %v1799
    %v2018 = vpop.f32.mrb[0].mxu0
    %v2019 = vadd.f32 %v1862, %v2018
    %v2020 = vpop.f32.mrb[0].mxu0
    %v2021 = vpop.f32.mrb[0].mxu0
    %v2022 = vadd.f32 %v1862, %v2021
    %v2023 = vpop.f32.mrb[0].mxu0
    %2024 = vmatprep.mubr.bf16.mxu0 %v1802
    %2025 = vmatmul.mubr.bf16.gmra.mrb[0].mxu0 %v1801
    %v2026 = vpop.f32.mrb[0].mxu0
    %v2027 = vadd.f32 %v1862, %v2026
    %v2028 = vpop.f32.mrb[0].mxu0
    %v2029 = vpop.f32.mrb[0].mxu0
    %v2030 = vadd.f32 %v1862, %v2029
    %v2031 = vpop.f32.mrb[0].mxu0
    %2032 = vmatprep.mubr.bf16.mxu0 %v1804
    %2033 = vmatmul.mubr.bf16.gmra.mrb[0].mxu0 %v1803
    %v2034 = vpop.f32.mrb[0].mxu0
    %v2035 = vadd.f32 %v1862, %v2034
    %v2036 = vpop.f32.mrb[0].mxu0
    %v2037 = vpop.f32.mrb[0].mxu0
    %v2038 = vadd.f32 %v1862, %v2037
    %v2039 = vpop.f32.mrb[0].mxu0
    %2040 = vmatprep.mubr.bf16.mxu0 %v1806
    %2041 = vmatmul.mubr.bf16.gmra.mrb[0].mxu0 %v1805
    %v2042 = vpop.f32.mrb[0].mxu0
    %v2043 = vadd.f32 %v1862, %v2042
    %v2044 = vpop.f32.mrb[0].mxu0
    %v2045 = vpop.f32.mrb[0].mxu0
    %v2046 = vadd.f32 %v1862, %v2045
    %v2047 = vpop.f32.mrb[0].mxu0
    %2048 = vmatprep.mubr.bf16.mxu0 %v1808
    %2049 = vmatmul.mubr.bf16.gmra.mrb[0].mxu0 %v1807
    %v2050 = vpop.f32.mrb[0].mxu0
    %v2051 = vadd.f32 %v1862, %v2050
    %v2052 = vpop.f32.mrb[0].mxu0
    %v2053 = vpop.f32.mrb[0].mxu0
    %v2054 = vadd.f32 %v1862, %v2053
    %v2055 = vpop.f32.mrb[0].mxu0
    %2056 = vmatprep.mubr.bf16.mxu0 %v1810
    %2057 = vmatmul.mubr.bf16.gmra.mrb[0].mxu0 %v1809
    %v2058 = vpop.f32.mrb[0].mxu0
    %v2059 = vadd.f32 %v1862, %v2058
    %v2060 = vpop.f32.mrb[0].mxu0
    %v2061 = vpop.f32.mrb[0].mxu0
    %v2062 = vadd.f32 %v1862, %v2061
    %v2063 = vpop.f32.mrb[0].mxu0
    %2064 = vmatprep.mubr.bf16.mxu0 %v1812
    %2065 = vmatmul.mubr.bf16.gmra.mrb[0].mxu0 %v1811
    %v2066 = vpop.f32.mrb[0].mxu0
    %v2067 = vadd.f32 %v1862, %v2066
    %v2068 = vpop.f32.mrb[0].mxu0
    %v2069 = vpop.f32.mrb[0].mxu0
    %v2070 = vadd.f32 %v1862, %v2069
    %v2071 = vpop.f32.mrb[0].mxu0
    %2072 = vmatprep.mubr.bf16.mxu0 %v1814
    %2073 = vmatmul.mubr.bf16.gmra.mrb[0].mxu0 %v1813
    %v2074 = vpop.f32.mrb[0].mxu0
    %v2075 = vadd.f32 %v1862, %v2074
    %v2076 = vpop.f32.mrb[0].mxu0
    %v2077 = vpop.f32.mrb[0].mxu0
    %v2078 = vadd.f32 %v1862, %v2077
    %v2079 = vpop.f32.mrb[0].mxu0
    %2080 = vmatprep.mubr.bf16.mxu0 %v1816
    %2081 = vmatmul.mubr.bf16.gmra.mrb[0].mxu0 %v1815
    %v2082 = vpop.f32.mrb[0].mxu0
    %v2083 = vadd.f32 %v1862, %v2082
    %v2084 = vpop.f32.mrb[0].mxu0
    %v2085 = vpop.f32.mrb[0].mxu0
    %v2086 = vadd.f32 %v1862, %v2085
    %v2087 = vpop.f32.mrb[0].mxu0
    %2088 = vmatprep.mubr.bf16.mxu0 %v1818
    %2089 = vmatmul.mubr.bf16.gmra.mrb[0].mxu0 %v1817
    %v2090 = vpop.f32.mrb[0].mxu0
    %v2091 = vadd.f32 %v1862, %v2090
    %v2092 = vpop.f32.mrb[0].mxu0
    %v2093 = vpop.f32.mrb[0].mxu0
    %v2094 = vadd.f32 %v1862, %v2093
    %v2095 = vpop.f32.mrb[0].mxu0
    %2096 = vmatprep.mubr.bf16.mxu0 %v1820
    %2097 = vmatmul.mubr.bf16.gmra.mrb[0].mxu0 %v1819
    %v2098 = vpop.f32.mrb[0].mxu0
    %v2099 = vadd.f32 %v1862, %v2098
    %v2100 = vpop.f32.mrb[0].mxu0
    %v2101 = vpop.f32.mrb[0].mxu0
    %v2102 = vadd.f32 %v1862, %v2101
    %v2103 = vpop.f32.mrb[0].mxu0
    %2104 = vmatprep.mubr.bf16.mxu0 %v1822
    %2105 = vmatmul.mubr.bf16.gmra.mrb[0].mxu0 %v1821
    %v2106 = vpop.f32.mrb[0].mxu0
    %v2107 = vadd.f32 %v1862, %v2106
    %v2108 = vpop.f32.mrb[0].mxu0
    %v2109 = vpop.f32.mrb[0].mxu0
    %v2110 = vadd.f32 %v1862, %v2109
    %v2111 = vpop.f32.mrb[0].mxu0
    %2112 = vmatprep.mubr.bf16.mxu0 %v1824
    %2113 = vmatmul.mubr.bf16.gmra.mrb[0].mxu0 %v1823
    %v2114 = vpop.f32.mrb[0].mxu0
    %v2115 = vadd.f32 %v1862, %v2114
    %v2116 = vpop.f32.mrb[0].mxu0
    %v2117 = vpop.f32.mrb[0].mxu0
    %v2118 = vadd.f32 %v1862, %v2117
    %v2119 = vpop.f32.mrb[0].mxu0
    %2120 = vdwg.mxu0
    %v2121 = vmax.f32 %v1995, 0.0
    %v2122 = vmax.f32 %v1998, 0.0
    %v2123 = vmax.f32 %v2003, 0.0
    %v2124 = vmax.f32 %v2006, 0.0
    %v2125 = vmax.f32 %v2011, 0.0
    %v2126 = vmax.f32 %v2014, 0.0
    %v2127 = vmax.f32 %v2019, 0.0
    %v2128 = vmax.f32 %v2022, 0.0
    %v2129 = vmax.f32 %v2027, 0.0
    %v2130 = vmax.f32 %v2030, 0.0
    %v2131 = vmax.f32 %v2035, 0.0
    %v2132 = vmax.f32 %v2038, 0.0
    %v2133 = vmax.f32 %v2043, 0.0
    %v2134 = vmax.f32 %v2046, 0.0
    %v2135 = vmax.f32 %v2051, 0.0
    %v2136 = vmax.f32 %v2054, 0.0
    %v2137 = vmax.f32 %v2059, 0.0
    %v2138 = vmax.f32 %v2062, 0.0
    %v2139 = vmax.f32 %v2067, 0.0
    %v2140 = vmax.f32 %v2070, 0.0
    %v2141 = vmax.f32 %v2075, 0.0
    %v2142 = vmax.f32 %v2078, 0.0
    %v2143 = vmax.f32 %v2083, 0.0
    %v2144 = vmax.f32 %v2086, 0.0
    %v2145 = vmax.f32 %v2091, 0.0
    %v2146 = vmax.f32 %v2094, 0.0
    %v2147 = vmax.f32 %v2099, 0.0
    %v2148 = vmax.f32 %v2102, 0.0
    %v2149 = vmax.f32 %v2107, 0.0
    %v2150 = vmax.f32 %v2110, 0.0
    %v2151 = vmax.f32 %v2115, 0.0
    %v2152 = vmax.f32 %v2118, 0.0
    %v2153 = vpack.c.bf16 %v2122, %v2121
    %v2154 = vpack.c.bf16 %v2124, %v2123
    %v2155 = vpack.c.bf16 %v2126, %v2125
    %v2156 = vpack.c.bf16 %v2128, %v2127
    %v2157 = vpack.c.bf16 %v2130, %v2129
    %v2158 = vpack.c.bf16 %v2132, %v2131
    %v2159 = vpack.c.bf16 %v2134, %v2133
    %v2160 = vpack.c.bf16 %v2136, %v2135
    %v2161 = vpack.c.bf16 %v2138, %v2137
    %v2162 = vpack.c.bf16 %v2140, %v2139
    %v2163 = vpack.c.bf16 %v2142, %v2141
    %v2164 = vpack.c.bf16 %v2144, %v2143
    %v2165 = vpack.c.bf16 %v2146, %v2145
    %v2166 = vpack.c.bf16 %v2148, %v2147
    %v2167 = vpack.c.bf16 %v2150, %v2149
    %v2168 = vpack.c.bf16 %v2152, %v2151
    %v2169 = vld [vmem:[#allocation4] sm:$0xf]
    %v2170 = vld [vmem:[#allocation4 + $0x4] sm:$0xf]
    %v2171 = vld [vmem:[#allocation4 + $0x8] sm:$0xf]
    %v2172 = vld [vmem:[#allocation4 + $0xc] sm:$0xf]
    %v2173 = vld [vmem:[#allocation4 + $0x10] sm:$0xf]
    %v2174 = vld [vmem:[#allocation4 + $0x14] sm:$0xf]
    %v2175 = vld [vmem:[#allocation4 + $0x18] sm:$0xf]
    %v2176 = vld [vmem:[#allocation4 + $0x1c] sm:$0xf]
    %v2177 = vld [vmem:[#allocation4 + $0x20] sm:$0xf]
    %v2178 = vld [vmem:[#allocation4 + $0x24] sm:$0xf]
    %v2179 = vld [vmem:[#allocation4 + $0x28] sm:$0xf]
    %v2180 = vld [vmem:[#allocation4 + $0x2c] sm:$0xf]
    %v2181 = vld [vmem:[#allocation4 + $0x30] sm:$0xf]
    %v2182 = vld [vmem:[#allocation4 + $0x34] sm:$0xf]
    %v2183 = vld [vmem:[#allocation4 + $0x38] sm:$0xf]
    %v2184 = vld [vmem:[#allocation4 + $0x3c] sm:$0xf]
    %v2185 = vld [vmem:[%s8] sm:$0x1]
    %v2187 = vlaneseq
    %v2188 = vshrl.u32 %v2187, 7
    %v2189 = vsub.s32 0, %v2188
    %v2190 = vrot.slane %v2185, %v2189
    %v2208 = vunpack.c.l.b16 %v2169
    %v2209 = vunpack.c.l.b16 %v2170
    %v2210 = vunpack.c.l.b16 %v2171
    %v2211 = vunpack.c.l.b16 %v2172
    %v2212 = vunpack.c.l.b16 %v2173
    %v2213 = vunpack.c.l.b16 %v2174
    %v2214 = vunpack.c.l.b16 %v2175
    %v2215 = vunpack.c.l.b16 %v2176
    %v2216 = vunpack.c.l.b16 %v2177
    %v2217 = vunpack.c.l.b16 %v2178
    %v2218 = vunpack.c.l.b16 %v2179
    %v2219 = vunpack.c.l.b16 %v2180
    %v2220 = vunpack.c.l.b16 %v2181
    %v2221 = vunpack.c.l.b16 %v2182
    %v2222 = vunpack.c.l.b16 %v2183
    %v2223 = vunpack.c.l.b16 %v2184
    %v2224 = vpack.c.b16 %v2209, %v2208
    %v2225 = vpack.c.b16 %v2211, %v2210
    %v2226 = vpack.c.b16 %v2213, %v2212
    %v2227 = vpack.c.b16 %v2215, %v2214
    %v2228 = vpack.c.b16 %v2217, %v2216
    %v2229 = vpack.c.b16 %v2219, %v2218
    %v2230 = vpack.c.b16 %v2221, %v2220
    %v2231 = vpack.c.b16 %v2223, %v2222
    %2240 = vmatprep.subr.bf16.mxu0 0
    %2241 = vmatpush1.bf16.msra.mxu0 %v2224
    %2242 = vmatprep.subr.bf16.mxu0 0
    %2243 = vmatpush1.bf16.msra.mxu0 %v2225
    %2244 = vmatprep.subr.bf16.mxu0 0
    %2245 = vmatpush1.bf16.msra.mxu0 %v2226
    %2246 = vmatprep.subr.bf16.mxu0 0
    %2247 = vmatpush1.bf16.msra.mxu0 %v2227
    %2248 = vmatprep.subr.bf16.mxu0 0
    %2249 = vmatpush1.bf16.msra.mxu0 %v2228
    %2250 = vmatprep.subr.bf16.mxu0 0
    %2251 = vmatpush1.bf16.msra.mxu0 %v2229
    %2252 = vmatprep.subr.bf16.mxu0 0
    %2253 = vmatpush1.bf16.msra.mxu0 %v2230
    %2254 = vmatprep.subr.bf16.mxu0 0
    %2255 = vmatpush1.bf16.msra.mxu0 %v2231
    %2256 = vmatprep.subr.bf16.mxu0 0
    %2257 = vmatpush1.bf16.msra.mxu0 0
    %2258 = vmatprep.subr.bf16.mxu0 0
    %2259 = vmatpush1.bf16.msra.mxu0 0
    %2260 = vmatprep.subr.bf16.mxu0 0
    %2261 = vmatpush1.bf16.msra.mxu0 0
    %2262 = vmatprep.subr.bf16.mxu0 0
    %2263 = vmatpush1.bf16.msra.mxu0 0
    %2264 = vmatprep.subr.bf16.mxu0 0
    %2265 = vmatpush1.bf16.msra.mxu0 0
    %2266 = vmatprep.subr.bf16.mxu0 0
    %2267 = vmatpush1.bf16.msra.mxu0 0
    %2268 = vmatprep.subr.bf16.mxu0 0
    %2269 = vmatpush1.bf16.msra.mxu0 0
    %2270 = vmatprep.subr.bf16.mxu0 0
    %2271 = vmatpush1.bf16.msra.mxu0 0
    %2272 = vmatprep.mubr.bf16.mxu0 0
    %2273 = vmatmul.mubr.bf16.gmra.mrb[0].mxu0 %v2153
    %v2274 = vpop.f32.mrb[0].mxu0
    %v2275 = vadd.f32 %v2190, %v2274
    %v2276 = vpop.f32.mrb[0].mxu0
    %v2277 = vpop.f32.mrb[0].mxu0
    %v2278 = vadd.f32 %v2190, %v2277
    %v2279 = vpop.f32.mrb[0].mxu0
    %2280 = vmatprep.mubr.bf16.mxu0 0
    %2281 = vmatmul.mubr.bf16.gmra.mrb[0].mxu0 %v2154
    %v2282 = vpop.f32.mrb[0].mxu0
    %v2283 = vadd.f32 %v2190, %v2282
    %v2284 = vpop.f32.mrb[0].mxu0
    %v2285 = vpop.f32.mrb[0].mxu0
    %v2286 = vadd.f32 %v2190, %v2285
    %v2287 = vpop.f32.mrb[0].mxu0
    %2288 = vmatprep.mubr.bf16.mxu0 0
    %2289 = vmatmul.mubr.bf16.gmra.mrb[0].mxu0 %v2155
    %v2290 = vpop.f32.mrb[0].mxu0
    %v2291 = vadd.f32 %v2190, %v2290
    %v2292 = vpop.f32.mrb[0].mxu0
    %v2293 = vpop.f32.mrb[0].mxu0
    %v2294 = vadd.f32 %v2190, %v2293
    %v2295 = vpop.f32.mrb[0].mxu0
    %2296 = vmatprep.mubr.bf16.mxu0 0
    %2297 = vmatmul.mubr.bf16.gmra.mrb[0].mxu0 %v2156
    %v2298 = vpop.f32.mrb[0].mxu0
    %v2299 = vadd.f32 %v2190, %v2298
    %v2300 = vpop.f32.mrb[0].mxu0
    %v2301 = vpop.f32.mrb[0].mxu0
    %v2302 = vadd.f32 %v2190, %v2301
    %v2303 = vpop.f32.mrb[0].mxu0
    %2304 = vmatprep.mubr.bf16.mxu0 0
    %2305 = vmatmul.mubr.bf16.gmra.mrb[0].mxu0 %v2157
    %v2306 = vpop.f32.mrb[0].mxu0
    %v2307 = vadd.f32 %v2190, %v2306
    %v2308 = vpop.f32.mrb[0].mxu0
    %v2309 = vpop.f32.mrb[0].mxu0
    %v2310 = vadd.f32 %v2190, %v2309
    %v2311 = vpop.f32.mrb[0].mxu0
    %2312 = vmatprep.mubr.bf16.mxu0 0
    %2313 = vmatmul.mubr.bf16.gmra.mrb[0].mxu0 %v2158
    %v2314 = vpop.f32.mrb[0].mxu0
    %v2315 = vadd.f32 %v2190, %v2314
    %v2316 = vpop.f32.mrb[0].mxu0
    %v2317 = vpop.f32.mrb[0].mxu0
    %v2318 = vadd.f32 %v2190, %v2317
    %v2319 = vpop.f32.mrb[0].mxu0
    %2320 = vmatprep.mubr.bf16.mxu0 0
    %2321 = vmatmul.mubr.bf16.gmra.mrb[0].mxu0 %v2159
    %v2322 = vpop.f32.mrb[0].mxu0
    %v2323 = vadd.f32 %v2190, %v2322
    %v2324 = vpop.f32.mrb[0].mxu0
    %v2325 = vpop.f32.mrb[0].mxu0
    %v2326 = vadd.f32 %v2190, %v2325
    %v2327 = vpop.f32.mrb[0].mxu0
    %2328 = vmatprep.mubr.bf16.mxu0 0
    %2329 = vmatmul.mubr.bf16.gmra.mrb[0].mxu0 %v2160
    %v2330 = vpop.f32.mrb[0].mxu0
    %v2331 = vadd.f32 %v2190, %v2330
    %v2332 = vpop.f32.mrb[0].mxu0
    %v2333 = vpop.f32.mrb[0].mxu0
    %v2334 = vadd.f32 %v2190, %v2333
    %v2335 = vpop.f32.mrb[0].mxu0
    %2336 = vmatprep.mubr.bf16.mxu0 0
    %2337 = vmatmul.mubr.bf16.gmra.mrb[0].mxu0 %v2161
    %v2338 = vpop.f32.mrb[0].mxu0
    %v2339 = vadd.f32 %v2190, %v2338
    %v2340 = vpop.f32.mrb[0].mxu0
    %v2341 = vpop.f32.mrb[0].mxu0
    %v2342 = vadd.f32 %v2190, %v2341
    %v2343 = vpop.f32.mrb[0].mxu0
    %2344 = vmatprep.mubr.bf16.mxu0 0
    %2345 = vmatmul.mubr.bf16.gmra.mrb[0].mxu0 %v2162
    %v2346 = vpop.f32.mrb[0].mxu0
    %v2347 = vadd.f32 %v2190, %v2346
    %v2348 = vpop.f32.mrb[0].mxu0
    %v2349 = vpop.f32.mrb[0].mxu0
    %v2350 = vadd.f32 %v2190, %v2349
    %v2351 = vpop.f32.mrb[0].mxu0
    %2352 = vmatprep.mubr.bf16.mxu0 0
    %2353 = vmatmul.mubr.bf16.gmra.mrb[0].mxu0 %v2163
    %v2354 = vpop.f32.mrb[0].mxu0
    %v2355 = vadd.f32 %v2190, %v2354
    %v2356 = vpop.f32.mrb[0].mxu0
    %v2357 = vpop.f32.mrb[0].mxu0
    %v2358 = vadd.f32 %v2190, %v2357
    %v2359 = vpop.f32.mrb[0].mxu0
    %2360 = vmatprep.mubr.bf16.mxu0 0
    %2361 = vmatmul.mubr.bf16.gmra.mrb[0].mxu0 %v2164
    %v2362 = vpop.f32.mrb[0].mxu0
    %v2363 = vadd.f32 %v2190, %v2362
    %v2364 = vpop.f32.mrb[0].mxu0
    %v2365 = vpop.f32.mrb[0].mxu0
    %v2366 = vadd.f32 %v2190, %v2365
    %v2367 = vpop.f32.mrb[0].mxu0
    %2368 = vmatprep.mubr.bf16.mxu0 0
    %2369 = vmatmul.mubr.bf16.gmra.mrb[0].mxu0 %v2165
    %v2370 = vpop.f32.mrb[0].mxu0
    %v2371 = vadd.f32 %v2190, %v2370
    %v2372 = vpop.f32.mrb[0].mxu0
    %v2373 = vpop.f32.mrb[0].mxu0
    %v2374 = vadd.f32 %v2190, %v2373
    %v2375 = vpop.f32.mrb[0].mxu0
    %2376 = vmatprep.mubr.bf16.mxu0 0
    %2377 = vmatmul.mubr.bf16.gmra.mrb[0].mxu0 %v2166
    %v2378 = vpop.f32.mrb[0].mxu0
    %v2379 = vadd.f32 %v2190, %v2378
    %v2380 = vpop.f32.mrb[0].mxu0
    %v2381 = vpop.f32.mrb[0].mxu0
    %v2382 = vadd.f32 %v2190, %v2381
    %v2383 = vpop.f32.mrb[0].mxu0
    %2384 = vmatprep.mubr.bf16.mxu0 0
    %2385 = vmatmul.mubr.bf16.gmra.mrb[0].mxu0 %v2167
    %v2386 = vpop.f32.mrb[0].mxu0
    %v2387 = vadd.f32 %v2190, %v2386
    %v2388 = vpop.f32.mrb[0].mxu0
    %v2389 = vpop.f32.mrb[0].mxu0
    %v2390 = vadd.f32 %v2190, %v2389
    %v2391 = vpop.f32.mrb[0].mxu0
    %2392 = vmatprep.mubr.bf16.mxu0 0
    %2393 = vmatmul.mubr.bf16.gmra.mrb[0].mxu0 %v2168
    %v2394 = vpop.f32.mrb[0].mxu0
    %v2395 = vadd.f32 %v2190, %v2394
    %v2396 = vpop.f32.mrb[0].mxu0
    %v2397 = vpop.f32.mrb[0].mxu0
    %v2398 = vadd.f32 %v2190, %v2397
    %v2399 = vpop.f32.mrb[0].mxu0
    %2400 = vdwg.mxu0
    %v2401 = vpack.c.bf16 %v2278, %v2275
    %v2402 = vpack.c.bf16 %v2286, %v2283
    %v2403 = vpack.c.bf16 %v2294, %v2291
    %v2404 = vpack.c.bf16 %v2302, %v2299
    %v2405 = vpack.c.bf16 %v2310, %v2307
    %v2406 = vpack.c.bf16 %v2318, %v2315
    %v2407 = vpack.c.bf16 %v2326, %v2323
    %v2408 = vpack.c.bf16 %v2334, %v2331
    %v2409 = vpack.c.bf16 %v2342, %v2339
    %v2410 = vpack.c.bf16 %v2350, %v2347
    %v2411 = vpack.c.bf16 %v2358, %v2355
    %v2412 = vpack.c.bf16 %v2366, %v2363
    %v2413 = vpack.c.bf16 %v2374, %v2371
    %v2414 = vpack.c.bf16 %v2382, %v2379
    %v2415 = vpack.c.bf16 %v2390, %v2387
    %v2416 = vpack.c.bf16 %v2398, %v2395
    %v2433 = vunpack.c.l.b16 %v2401
    %v2434 = vunpack.c.h.b16 %v2401
    %v2435 = vunpack.c.l.b16 %v2402
    %v2436 = vunpack.c.h.b16 %v2402
    %v2437 = vunpack.c.l.b16 %v2403
    %v2438 = vunpack.c.h.b16 %v2403
    %v2439 = vunpack.c.l.b16 %v2404
    %v2440 = vunpack.c.h.b16 %v2404
    %v2441 = vunpack.c.l.b16 %v2405
    %v2442 = vunpack.c.h.b16 %v2405
    %v2443 = vunpack.c.l.b16 %v2406
    %v2444 = vunpack.c.h.b16 %v2406
    %v2445 = vunpack.c.l.b16 %v2407
    %v2446 = vunpack.c.h.b16 %v2407
    %v2447 = vunpack.c.l.b16 %v2408
    %v2448 = vunpack.c.h.b16 %v2408
    %v2449 = vunpack.c.l.b16 %v2409
    %v2450 = vunpack.c.h.b16 %v2409
    %v2451 = vunpack.c.l.b16 %v2410
    %v2452 = vunpack.c.h.b16 %v2410
    %v2453 = vunpack.c.l.b16 %v2411
    %v2454 = vunpack.c.h.b16 %v2411
    %v2455 = vunpack.c.l.b16 %v2412
    %v2456 = vunpack.c.h.b16 %v2412
    %v2457 = vunpack.c.l.b16 %v2413
    %v2458 = vunpack.c.h.b16 %v2413
    %v2459 = vunpack.c.l.b16 %v2414
    %v2460 = vunpack.c.h.b16 %v2414
    %v2461 = vunpack.c.l.b16 %v2415
    %v2462 = vunpack.c.h.b16 %v2415
    %v2463 = vunpack.c.l.b16 %v2416
    %v2464 = vunpack.c.h.b16 %v2416
    %v2465 = vpack.c.b16 %v2433, %v2433
    %v2466 = vpack.c.b16 %v2434, %v2434
    %v2467 = vpack.c.b16 %v2435, %v2435
    %v2468 = vpack.c.b16 %v2436, %v2436
    %v2469 = vpack.c.b16 %v2437, %v2437
    %v2470 = vpack.c.b16 %v2438, %v2438
    %v2471 = vpack.c.b16 %v2439, %v2439
    %v2472 = vpack.c.b16 %v2440, %v2440
    %v2473 = vpack.c.b16 %v2441, %v2441
    %v2474 = vpack.c.b16 %v2442, %v2442
    %v2475 = vpack.c.b16 %v2443, %v2443
    %v2476 = vpack.c.b16 %v2444, %v2444
    %v2477 = vpack.c.b16 %v2445, %v2445
    %v2478 = vpack.c.b16 %v2446, %v2446
    %v2479 = vpack.c.b16 %v2447, %v2447
    %v2480 = vpack.c.b16 %v2448, %v2448
    %v2481 = vpack.c.b16 %v2449, %v2449
    %v2482 = vpack.c.b16 %v2450, %v2450
    %v2483 = vpack.c.b16 %v2451, %v2451
    %v2484 = vpack.c.b16 %v2452, %v2452
    %v2485 = vpack.c.b16 %v2453, %v2453
    %v2486 = vpack.c.b16 %v2454, %v2454
    %v2487 = vpack.c.b16 %v2455, %v2455
    %v2488 = vpack.c.b16 %v2456, %v2456
    %v2489 = vpack.c.b16 %v2457, %v2457
    %v2490 = vpack.c.b16 %v2458, %v2458
    %v2491 = vpack.c.b16 %v2459, %v2459
    %v2492 = vpack.c.b16 %v2460, %v2460
    %v2493 = vpack.c.b16 %v2461, %v2461
    %v2494 = vpack.c.b16 %v2462, %v2462
    %v2495 = vpack.c.b16 %v2463, %v2463
    %v2496 = vpack.c.b16 %v2464, %v2464
    %2529 = vst [vmem:[%s9] sm:$0xf] %v2465
    %2530 = vst [vmem:[%s9 + $0x4] sm:$0xf] %v2466
    %2531 = vst [vmem:[%s9 + $0x8] sm:$0xf] %v2467
    %2532 = vst [vmem:[%s9 + $0xc] sm:$0xf] %v2468
    %2533 = vst [vmem:[%s9 + $0x10] sm:$0xf] %v2469
    %2534 = vst [vmem:[%s9 + $0x14] sm:$0xf] %v2470
    %2535 = vst [vmem:[%s9 + $0x18] sm:$0xf] %v2471
    %2536 = vst [vmem:[%s9 + $0x1c] sm:$0xf] %v2472
    %2537 = vst [vmem:[%s9 + $0x20] sm:$0xf] %v2473
    %2538 = vst [vmem:[%s9 + $0x24] sm:$0xf] %v2474
    %2539 = vst [vmem:[%s9 + $0x28] sm:$0xf] %v2475
    %2540 = vst [vmem:[%s9 + $0x2c] sm:$0xf] %v2476
    %2541 = vst [vmem:[%s9 + $0x30] sm:$0xf] %v2477
    %2542 = vst [vmem:[%s9 + $0x34] sm:$0xf] %v2478
    %2543 = vst [vmem:[%s9 + $0x38] sm:$0xf] %v2479
    %2544 = vst [vmem:[%s9 + $0x3c] sm:$0xf] %v2480
    %2545 = vst [vmem:[%s9 + $0x40] sm:$0xf] %v2481
    %2546 = vst [vmem:[%s9 + $0x44] sm:$0xf] %v2482
    %2547 = vst [vmem:[%s9 + $0x48] sm:$0xf] %v2483
    %2548 = vst [vmem:[%s9 + $0x4c] sm:$0xf] %v2484
    %2549 = vst [vmem:[%s9 + $0x50] sm:$0xf] %v2485
    %2550 = vst [vmem:[%s9 + $0x54] sm:$0xf] %v2486
    %2551 = vst [vmem:[%s9 + $0x58] sm:$0xf] %v2487
    %2552 = vst [vmem:[%s9 + $0x5c] sm:$0xf] %v2488
    %2553 = vst [vmem:[%s9 + $0x60] sm:$0xf] %v2489
    %2554 = vst [vmem:[%s9 + $0x64] sm:$0xf] %v2490
    %2555 = vst [vmem:[%s9 + $0x68] sm:$0xf] %v2491
    %2556 = vst [vmem:[%s9 + $0x6c] sm:$0xf] %v2492
    %2557 = vst [vmem:[%s9 + $0x70] sm:$0xf] %v2493
    %2558 = vst [vmem:[%s9 + $0x74] sm:$0xf] %v2494
    %2559 = vst [vmem:[%s9 + $0x78] sm:$0xf] %v2495
    %2560 = vst [vmem:[%s9 + $0x7c] sm:$0xf] %v2496
    // Predicated region
    $region46: #{qnetwork_forward.1} parent=1 // pred_check
      _
    $region47: #{qnetwork_forward.1} parent=1 // pred_check_branch
      %2562 = sbr.rel (0) target = $region49
    $region48: #{qnetwork_forward.1} parent=1 // pred_region
      _
    $region49: #{qnetwork_forward.1} parent=1 // pred_fallthru
      _
    // Predicated region
    $region50: #{qnetwork_forward.1} parent=1 // pred_check
      _
    $region51: #{qnetwork_forward.1} parent=1 // pred_check_branch
      %2564 = sbr.rel (0) target = $region53
    $region52: #{qnetwork_forward.1} parent=1 // pred_region
      _
    $region53: #{qnetwork_forward.1} parent=1 // pred_fallthru
      _
    %2565 = vsyncpa [#allocation3], 1
    %2566 = vsyncpa [#allocation5], 1

</llo_original>
